<compile_context>
chip_gen: v7x
topology: tpu7x:2x2x1
jax: 0.10.0
libtpu: 0.0.40
codegen_flags: <defaults>
</compile_context>

<pallas_src>
import functools

import numpy as np
import jax
import jax.numpy as jnp
from jax import lax
from jax.experimental import pallas as pl
from jax.experimental.pallas import tpu as pltpu

N_EMBED = 32
BLOCK_SIZE = 8
N_HEAD = 4
HEAD_SIZE = N_EMBED // N_HEAD
LN_EPS = 1e-5
LANE = 128
MASK_NEG = -1e30  # finite large-negative (diagonal always unmasked -> no NaN risk)


def _slab_layout(C, BT):
    """Row/lane offsets of every operand inside the single packed weight slab.

    Column blocks are LANE(=128)-lane wide so every slice starts on a vreg
    boundary; all row offsets are multiples of 8 (sublane-tile aligned).
      lanes [0,   cw): rows [0,3C)        fused QKV^T (scale folded into Q rows)
                       rows [3C,3C+8)     LN gammas/betas + biases (one 8x4C tile)
                       rows [3C+8, +BT)   additive block-diag causal mask bias
      lanes [cw, 2cw): rows [0,C)         Wproj
                       rows [C,5C)        ff W2
      lanes [2cw,3cw): rows [0,C)         ff W1
    """
    cw = max(LANE, 4 * C)
    r_vec = 3 * C
    r_mask = r_vec + 8
    rows = max(5 * C, r_mask + BT)
    rows = -(-rows // 8) * 8
    return cw, r_vec, r_mask, rows


def _layernorm(x, gamma, beta):
    mu = jnp.mean(x, axis=-1, keepdims=True)
    var = jnp.mean((x - mu) ** 2, axis=-1, keepdims=True)
    return (x - mu) * lax.rsqrt(var + LN_EPS) * gamma + beta


def block_kernel(n_head, head_size, x_ref, w_ref, o_ref):
    x = x_ref[...]                                    # (BT, C) fp32
    BT, C = x.shape
    hs = head_size
    cw, r_vec, r_mask, _ = _slab_layout(C, BT)

    # Small-vector tile: one (8, 4C) vreg-aligned load, sliced in-register.
    vecs = w_ref[r_vec:r_vec + 8, 0:4 * C]
    g1, b1 = vecs[0:1, 0:C], vecs[1:2, 0:C]
    g2, b2 = vecs[2:3, 0:C], vecs[3:4, 0:C]
    bproj, bff2 = vecs[4:5, 0:C], vecs[5:6, 0:C]
    bff1 = vecs[6:7, :]                               # (1, 4C)

    # Additive block-diagonal causal mask (0 keep / -1e30 drop), precomputed at
    # pack time: nothing but one VPU add on the score path per head.
    mask_bias = w_ref[r_mask:r_mask + BT, 0:BT]       # (BT, BT)

    # --- multi-head causal self-attention on LN1(x) ---
    xln = _layernorm(x, g1, b1)                       # (BT, C)

    # Fused QKV projection in *transposed* layout: (3C, C) x (BT, C)^T ->
    # (3C, BT).  One MXU push, rhs-transposed contraction (no materialized
    # transpose); per-head slices below are sublane slices at multiples of 8
    # (tile-aligned => free).  C**-0.5 is already folded into the Q rows.
    wqkvT = w_ref[0:3 * C, 0:C]
    qkvT = lax.dot_general(wqkvT, xln, (((1,), (1,)), ((), ())),
                           preferred_element_type=jnp.float32)   # (3C, BT)

    sa = None
    for h in range(n_head):
        qT = qkvT[h * hs:(h + 1) * hs, :]                     # (hs, BT)
        kT = qkvT[C + h * hs:C + (h + 1) * hs, :]             # (hs, BT)
        vT = qkvT[2 * C + h * hs:2 * C + (h + 1) * hs, :]     # (hs, BT)

        # scores = q @ k^T == qT^T @ kT : one tiny (hs,BT) transpose, then a
        # standard-form matmul (kT is already the (K, N) operand -> no k.T).
        wei = jnp.dot(qT.T, kT, preferred_element_type=jnp.float32)   # (BT, BT)
        wei = wei + mask_bias
        m = jnp.max(wei, axis=-1, keepdims=True)
        e = jnp.exp(wei - m)
        p = e * pl.reciprocal(jnp.sum(e, axis=-1, keepdims=True), approx=True)

        # out_h = p @ v_h as an rhs-transposed contraction (no v transpose).
        head_out = lax.dot_general(p, vT, (((1,), (1,)), ((), ())),
                                   preferred_element_type=jnp.float32)  # (BT, hs)

        # Accumulate this head through its Wproj row-slice: no lane-axis concat
        # of 8-lane head tiles.  (On v5e/v6e this costs 3 extra tiny MXU pushes
        # vs concat+single-proj; worth measuring if MRF-pop bound.)
        wproj_h = w_ref[h * hs:(h + 1) * hs, cw:cw + C]        # (hs, C)
        contrib = jnp.dot(head_out, wproj_h,
                          preferred_element_type=jnp.float32)  # (BT, C)
        sa = contrib if sa is None else sa + contrib

    x1 = x + sa + bproj

    # --- feed-forward on LN2(x1) ---
    x2ln = _layernorm(x1, g2, b2)
    w1 = w_ref[0:C, 2 * cw:2 * cw + 4 * C]            # (C, 4C)
    w2 = w_ref[C:5 * C, cw:cw + C]                    # (4C, C)
    hdn = jnp.dot(x2ln, w1, preferred_element_type=jnp.float32) + bff1
    hdn = jnp.maximum(hdn, 0.0)
    ff = jnp.dot(hdn, w2, preferred_element_type=jnp.float32) + bff2

    # NOTE: at C=32 this store is a masked 32/128-lane vst; if the template is
    # scaled up, make the output last dim a multiple of 128 (lane-dense stores).
    o_ref[...] = x1 + ff


def pack_block_inputs(params, B, T):
    """One-time packing of all Block parameters into a single aligned slab.

    Call at init time, NOT per forward call (per-call packing was the dominant
    wall-clock cost at these shapes)."""
    (wq, wk, wv, wproj, bproj, g1, b1, g2, b2, w1, bff1, w2, bff2) = [
        np.asarray(p, np.float32) for p in params]
    C = wq.shape[0]
    BT = B * T
    cw, r_vec, r_mask, rows = _slab_layout(C, BT)
    assert BT <= cw and r_mask + BT <= rows

    slab = np.zeros((rows, 3 * cw), np.float32)
    scale = np.float32(C) ** np.float32(-0.5)
    # Fused, transposed QKV with the score scale folded into the Q rows.
    slab[0:C, 0:C] = wq.T * scale
    slab[C:2 * C, 0:C] = wk.T
    slab[2 * C:3 * C, 0:C] = wv.T
    slab[0:C, cw:cw + C] = wproj
    slab[C:5 * C, cw:cw + C] = w2
    slab[0:C, 2 * cw:2 * cw + 4 * C] = w1
    # LN / bias vectors, one per sublane of a single (8, 4C) tile.
    slab[r_vec + 0, 0:C] = g1[0]
    slab[r_vec + 1, 0:C] = b1[0]
    slab[r_vec + 2, 0:C] = g2[0]
    slab[r_vec + 3, 0:C] = b2[0]
    slab[r_vec + 4, 0:C] = bproj[0]
    slab[r_vec + 5, 0:C] = bff2[0]
    slab[r_vec + 6, 0:4 * C] = bff1[0]
    # Block-diagonal causal mask as an additive bias tile.
    r = np.arange(BT)
    keep = (r[:, None] // T == r[None, :] // T) & (r[:, None] >= r[None, :])
    slab[r_mask:r_mask + BT, 0:BT] = np.where(keep, 0.0, MASK_NEG)
    return jnp.asarray(slab)


@jax.jit
def block_forward(x, slab):
    """Jitted forward: reshape + one single-step pallas_call, nothing else."""
    B, T, C = x.shape
    BT = B * T
    xf = x.reshape(BT, C)                             # fold batch into rows

    kernel = functools.partial(block_kernel, N_HEAD, HEAD_SIZE)
    out = pl.pallas_call(
        kernel,
        out_shape=jax.ShapeDtypeStruct((BT, C), jnp.float32),
        grid_spec=pltpu.PrefetchScalarGridSpec(
            num_scalar_prefetch=0,
            # Single fused step: at BT=16 the kernel is overhead-bound so the
            # whole batch lives in one resident block (fixed ~0.35us step cost
            # paid once).  TODO(synk): beyond toy shapes, tile B*T rows onto a
            # "parallel" grid axis (v7x: 2 TCs/chip) and re-derive tile sizes
            # against v7x's 64 MiB VMEM; default double-buffering is kept here
            # (no extra pipeline depth -- nothing to pipeline at grid=(1,)).
            grid=(1,),
            in_specs=[
                pl.BlockSpec((BT, C), lambda i: (0, 0)),        # activations
                pl.BlockSpec(slab.shape, lambda i: (0, 0)),     # packed weights
            ],
            out_specs=pl.BlockSpec((BT, C), lambda i: (0, 0)),
        ),
        compiler_params=pltpu.CompilerParams(
            dimension_semantics=("arbitrary",)),
    )(xf, slab)
    return out.reshape(B, T, C)


def init_params(key):
    ks = jax.random.split(key, 10)
    std = 0.02
    C = N_EMBED
    wq = jax.random.normal(ks[0], (C, C), jnp.float32) * std   # cols grouped by head
    wk = jax.random.normal(ks[1], (C, C), jnp.float32) * std
    wv = jax.random.normal(ks[2], (C, C), jnp.float32) * std
    wproj = jax.random.normal(ks[3], (C, C), jnp.float32) * std
    bproj = jax.random.normal(ks[4], (1, C), jnp.float32) * std
    g1 = jnp.ones((1, C), jnp.float32)
    b1 = jnp.zeros((1, C), jnp.float32)
    g2 = jnp.ones((1, C), jnp.float32)
    b2 = jnp.zeros((1, C), jnp.float32)
    w1 = jax.random.normal(ks[5], (C, 4 * C), jnp.float32) * std
    bff1 = jax.random.normal(ks[6], (1, 4 * C), jnp.float32) * std
    w2 = jax.random.normal(ks[7], (4 * C, C), jnp.float32) * std
    bff2 = jax.random.normal(ks[8], (1, C), jnp.float32) * std
    return (wq, wk, wv, wproj, bproj, g1, b1, g2, b2, w1, bff1, w2, bff2)


def block_reference(x, params):
    (wq, wk, wv, wproj, bproj, g1, b1, g2, b2, w1, bff1, w2, bff2) = params
    B, T, C = x.shape

    def ln(z, g, b):
        mu = jnp.mean(z, -1, keepdims=True)
        var = jnp.mean((z - mu) ** 2, -1, keepdims=True)
        return (z - mu) / jnp.sqrt(var + LN_EPS) * g + b

    xln = ln(x, g1, b1)
    q = xln @ wq
    k = xln @ wk
    v = xln @ wv
    mask = jnp.tril(jnp.ones((T, T), bool))
    outs = []
    for h in range(N_HEAD):
        sl = slice(h * HEAD_SIZE, (h + 1) * HEAD_SIZE)
        wei = jnp.einsum("btd,bsd->bts", q[..., sl], k[..., sl]) * C ** (-0.5)
        wei = jnp.where(mask, wei, -jnp.inf)
        wei = jax.nn.softmax(wei, axis=-1)
        outs.append(jnp.einsum("bts,bsd->btd", wei, v[..., sl]))
    sa = jnp.concatenate(outs, -1) @ wproj + bproj
    x1 = x + sa
    ff = jnp.maximum(ln(x1, g2, b2) @ w1 + bff1, 0.0) @ w2 + bff2
    return x1 + ff


if __name__ == "__main__":
    key = jax.random.PRNGKey(0)
    kx, kp = jax.random.split(key)
    B, T, C = 2, BLOCK_SIZE, N_EMBED          # x: (2, 8, 32)
    x = jax.random.normal(kx, (B, T, C), jnp.float32)
    params = init_params(kp)

    # Pack once (init-time), reuse for every forward call.
    slab = pack_block_inputs(params, B, T)

    out = block_forward(x, slab)
    out = jax.block_until_ready(out)

    ref = block_reference(x, params)
    assert out.shape == (B, T, C)
    # tolerance slightly relaxed vs 1e-4 for the approx (EUP) softmax reciprocal
    assert jnp.allclose(out, ref, atol=1e-3, rtol=1e-3), "mismatch vs reference"
    print("KERNEL_OK")
</pallas_src>

<mosaic_0001>
module attributes {stable_mosaic.version = 11 : i64} {
  func.func @block_kernel(%arg0: i32, %arg1: memref<16x32xf32, #tpu.memory_space<vmem>>, %arg2: memref<160x384xf32, #tpu.memory_space<vmem>>, %arg3: memref<16x32xf32, #tpu.memory_space<vmem>>) attributes {dimension_semantics = [#tpu.dimension_semantics<arbitrary>], iteration_bounds = array<i64: 1>, scalar_prefetch = 0 : i64, scratch_operands = 0 : i64, tpu.core_type = #tpu.core_type<tc>, window_params = [{pipeline_mode = #tpu.pipeline_mode<synchronous>, transform_indices = @transform_0, window_bounds = array<i64: 16, 32>}, {pipeline_mode = #tpu.pipeline_mode<synchronous>, transform_indices = @transform_1, window_bounds = array<i64: 160, 384>}, {pipeline_mode = #tpu.pipeline_mode<synchronous>, transform_indices = @transform_2, window_bounds = array<i64: 16, 32>}]} {
    %c0 = arith.constant 0 : index
    %c0_0 = arith.constant 0 : index
    %0 = vector.load %arg1[%c0, %c0_0] : memref<16x32xf32, #tpu.memory_space<vmem>>, vector<16x32xf32>
    %c96 = arith.constant 96 : index
    %c0_1 = arith.constant 0 : index
    %1 = vector.load %arg2[%c96, %c0_1] : memref<160x384xf32, #tpu.memory_space<vmem>>, vector<8x128xf32>
    %2 = vector.extract_strided_slice %1 {offsets = [0, 0], sizes = [1, 32], strides = [1, 1]} : vector<8x128xf32> to vector<1x32xf32>
    %3 = vector.extract_strided_slice %1 {offsets = [1, 0], sizes = [1, 32], strides = [1, 1]} : vector<8x128xf32> to vector<1x32xf32>
    %4 = vector.extract_strided_slice %1 {offsets = [2, 0], sizes = [1, 32], strides = [1, 1]} : vector<8x128xf32> to vector<1x32xf32>
    %5 = vector.extract_strided_slice %1 {offsets = [3, 0], sizes = [1, 32], strides = [1, 1]} : vector<8x128xf32> to vector<1x32xf32>
    %6 = vector.extract_strided_slice %1 {offsets = [4, 0], sizes = [1, 32], strides = [1, 1]} : vector<8x128xf32> to vector<1x32xf32>
    %7 = vector.extract_strided_slice %1 {offsets = [5, 0], sizes = [1, 32], strides = [1, 1]} : vector<8x128xf32> to vector<1x32xf32>
    %8 = vector.extract_strided_slice %1 {offsets = [6, 0], sizes = [1, 128], strides = [1, 1]} : vector<8x128xf32> to vector<1x128xf32>
    %c104 = arith.constant 104 : index
    %c0_2 = arith.constant 0 : index
    %9 = vector.load %arg2[%c104, %c0_2] : memref<160x384xf32, #tpu.memory_space<vmem>>, vector<16x16xf32>
    %cst = arith.constant dense<0.000000e+00> : vector<16xf32>
    %10 = vector.multi_reduction <add>, %0, %cst [1] : vector<16x32xf32> to vector<16xf32>
    %11 = vector.shape_cast %10 : vector<16xf32> to vector<16x1xf32>
    %cst_3 = arith.constant 3.200000e+01 : f32
    %12 = vector.broadcast %cst_3 : f32 to vector<16x1xf32>
    %13 = arith.divf %11, %12 : vector<16x1xf32>
    %14 = vector.broadcast %13 : vector<16x1xf32> to vector<16x32xf32>
    %15 = arith.subf %0, %14 : vector<16x32xf32>
    %16 = arith.mulf %15, %15 : vector<16x32xf32>
    %cst_4 = arith.constant dense<0.000000e+00> : vector<16xf32>
    %17 = vector.multi_reduction <add>, %16, %cst_4 [1] : vector<16x32xf32> to vector<16xf32>
    %18 = vector.shape_cast %17 : vector<16xf32> to vector<16x1xf32>
    %cst_5 = arith.constant 3.200000e+01 : f32
    %19 = vector.broadcast %cst_5 : f32 to vector<16x1xf32>
    %20 = arith.divf %18, %19 : vector<16x1xf32>
    %21 = vector.broadcast %13 : vector<16x1xf32> to vector<16x32xf32>
    %22 = arith.subf %0, %21 : vector<16x32xf32>
    %cst_6 = arith.constant 9.99999974E-6 : f32
    %23 = vector.broadcast %cst_6 : f32 to vector<16x1xf32>
    %24 = arith.addf %20, %23 : vector<16x1xf32>
    %25 = math.rsqrt %24 : vector<16x1xf32>
    %26 = vector.broadcast %25 : vector<16x1xf32> to vector<16x32xf32>
    %27 = arith.mulf %22, %26 : vector<16x32xf32>
    %28 = vector.broadcast %2 : vector<1x32xf32> to vector<16x32xf32>
    %29 = arith.mulf %27, %28 : vector<16x32xf32>
    %30 = vector.broadcast %3 : vector<1x32xf32> to vector<16x32xf32>
    %31 = arith.addf %29, %30 : vector<16x32xf32>
    %c0_7 = arith.constant 0 : index
    %c0_8 = arith.constant 0 : index
    %32 = vector.load %arg2[%c0_7, %c0_8] : memref<160x384xf32, #tpu.memory_space<vmem>>, vector<96x32xf32>
    %cst_9 = arith.constant dense<0.000000e+00> : vector<96x16xf32>
    %33 = tpu.matmul %32, %31, %cst_9 {dimension_numbers = #tpu.dot_dimension_numbers<[1], [1], [0], [0], [0, 0, 1, 0], [], []>} : vector<96x32xf32>, vector<16x32xf32>, vector<96x16xf32> -> vector<96x16xf32>
    %34 = vector.extract_strided_slice %33 {offsets = [0, 0], sizes = [8, 16], strides = [1, 1]} : vector<96x16xf32> to vector<8x16xf32>
    %35 = vector.extract_strided_slice %33 {offsets = [32, 0], sizes = [8, 16], strides = [1, 1]} : vector<96x16xf32> to vector<8x16xf32>
    %36 = vector.extract_strided_slice %33 {offsets = [64, 0], sizes = [8, 16], strides = [1, 1]} : vector<96x16xf32> to vector<8x16xf32>
    %37 = tpu.transpose %34, [1, 0] : vector<8x16xf32> -> vector<16x8xf32>
    %cst_10 = arith.constant dense<0.000000e+00> : vector<16x16xf32>
    %38 = tpu.matmul %37, %35, %cst_10 {dimension_numbers = #tpu.dot_dimension_numbers<[1], [0], [0], [1], [0, 0, 1, 1], [], []>} : vector<16x8xf32>, vector<8x16xf32>, vector<16x16xf32> -> vector<16x16xf32>
    %39 = arith.addf %38, %9 : vector<16x16xf32>
    %cst_11 = arith.constant dense<0xFF800000> : vector<16xf32>
    %40 = vector.multi_reduction <maximumf>, %39, %cst_11 [1] : vector<16x16xf32> to vector<16xf32>
    %41 = vector.shape_cast %40 : vector<16xf32> to vector<16x1xf32>
    %42 = vector.broadcast %41 : vector<16x1xf32> to vector<16x16xf32>
    %43 = arith.subf %39, %42 : vector<16x16xf32>
    %44 = math.exp %43 : vector<16x16xf32>
    %cst_12 = arith.constant dense<0.000000e+00> : vector<16xf32>
    %45 = vector.multi_reduction <add>, %44, %cst_12 [1] : vector<16x16xf32> to vector<16xf32>
    %46 = vector.shape_cast %45 : vector<16xf32> to vector<16x1xf32>
    %47 = tpu.reciprocal %46 {approx = true} : vector<16x1xf32> -> vector<16x1xf32>
    %48 = vector.broadcast %47 : vector<16x1xf32> to vector<16x16xf32>
    %49 = arith.mulf %44, %48 : vector<16x16xf32>
    %cst_13 = arith.constant dense<0.000000e+00> : vector<16x8xf32>
    %50 = tpu.matmul %49, %36, %cst_13 {dimension_numbers = #tpu.dot_dimension_numbers<[1], [1], [0], [0], [0, 0, 1, 0], [], []>} : vector<16x16xf32>, vector<8x16xf32>, vector<16x8xf32> -> vector<16x8xf32>
    %c0_14 = arith.constant 0 : index
    %c128 = arith.constant 128 : index
    %51 = vector.load %arg2[%c0_14, %c128] : memref<160x384xf32, #tpu.memory_space<vmem>>, vector<8x32xf32>
    %cst_15 = arith.constant dense<0.000000e+00> : vector<16x32xf32>
    %52 = tpu.matmul %50, %51, %cst_15 {dimension_numbers = #tpu.dot_dimension_numbers<[1], [0], [0], [1], [0, 0, 1, 1], [], []>} : vector<16x8xf32>, vector<8x32xf32>, vector<16x32xf32> -> vector<16x32xf32>
    %53 = vector.extract_strided_slice %33 {offsets = [8, 0], sizes = [8, 16], strides = [1, 1]} : vector<96x16xf32> to vector<8x16xf32>
    %54 = vector.extract_strided_slice %33 {offsets = [40, 0], sizes = [8, 16], strides = [1, 1]} : vector<96x16xf32> to vector<8x16xf32>
    %55 = vector.extract_strided_slice %33 {offsets = [72, 0], sizes = [8, 16], strides = [1, 1]} : vector<96x16xf32> to vector<8x16xf32>
    %56 = tpu.transpose %53, [1, 0] : vector<8x16xf32> -> vector<16x8xf32>
    %cst_16 = arith.constant dense<0.000000e+00> : vector<16x16xf32>
    %57 = tpu.matmul %56, %54, %cst_16 {dimension_numbers = #tpu.dot_dimension_numbers<[1], [0], [0], [1], [0, 0, 1, 1], [], []>} : vector<16x8xf32>, vector<8x16xf32>, vector<16x16xf32> -> vector<16x16xf32>
    %58 = arith.addf %57, %9 : vector<16x16xf32>
    %cst_17 = arith.constant dense<0xFF800000> : vector<16xf32>
    %59 = vector.multi_reduction <maximumf>, %58, %cst_17 [1] : vector<16x16xf32> to vector<16xf32>
    %60 = vector.shape_cast %59 : vector<16xf32> to vector<16x1xf32>
    %61 = vector.broadcast %60 : vector<16x1xf32> to vector<16x16xf32>
    %62 = arith.subf %58, %61 : vector<16x16xf32>
    %63 = math.exp %62 : vector<16x16xf32>
    %cst_18 = arith.constant dense<0.000000e+00> : vector<16xf32>
    %64 = vector.multi_reduction <add>, %63, %cst_18 [1] : vector<16x16xf32> to vector<16xf32>
    %65 = vector.shape_cast %64 : vector<16xf32> to vector<16x1xf32>
    %66 = tpu.reciprocal %65 {approx = true} : vector<16x1xf32> -> vector<16x1xf32>
    %67 = vector.broadcast %66 : vector<16x1xf32> to vector<16x16xf32>
    %68 = arith.mulf %63, %67 : vector<16x16xf32>
    %cst_19 = arith.constant dense<0.000000e+00> : vector<16x8xf32>
    %69 = tpu.matmul %68, %55, %cst_19 {dimension_numbers = #tpu.dot_dimension_numbers<[1], [1], [0], [0], [0, 0, 1, 0], [], []>} : vector<16x16xf32>, vector<8x16xf32>, vector<16x8xf32> -> vector<16x8xf32>
    %c8 = arith.constant 8 : index
    %c128_20 = arith.constant 128 : index
    %70 = vector.load %arg2[%c8, %c128_20] : memref<160x384xf32, #tpu.memory_space<vmem>>, vector<8x32xf32>
    %cst_21 = arith.constant dense<0.000000e+00> : vector<16x32xf32>
    %71 = tpu.matmul %69, %70, %cst_21 {dimension_numbers = #tpu.dot_dimension_numbers<[1], [0], [0], [1], [0, 0, 1, 1], [], []>} : vector<16x8xf32>, vector<8x32xf32>, vector<16x32xf32> -> vector<16x32xf32>
    %72 = arith.addf %52, %71 : vector<16x32xf32>
    %73 = vector.extract_strided_slice %33 {offsets = [16, 0], sizes = [8, 16], strides = [1, 1]} : vector<96x16xf32> to vector<8x16xf32>
    %74 = vector.extract_strided_slice %33 {offsets = [48, 0], sizes = [8, 16], strides = [1, 1]} : vector<96x16xf32> to vector<8x16xf32>
    %75 = vector.extract_strided_slice %33 {offsets = [80, 0], sizes = [8, 16], strides = [1, 1]} : vector<96x16xf32> to vector<8x16xf32>
    %76 = tpu.transpose %73, [1, 0] : vector<8x16xf32> -> vector<16x8xf32>
    %cst_22 = arith.constant dense<0.000000e+00> : vector<16x16xf32>
    %77 = tpu.matmul %76, %74, %cst_22 {dimension_numbers = #tpu.dot_dimension_numbers<[1], [0], [0], [1], [0, 0, 1, 1], [], []>} : vector<16x8xf32>, vector<8x16xf32>, vector<16x16xf32> -> vector<16x16xf32>
    %78 = arith.addf %77, %9 : vector<16x16xf32>
    %cst_23 = arith.constant dense<0xFF800000> : vector<16xf32>
    %79 = vector.multi_reduction <maximumf>, %78, %cst_23 [1] : vector<16x16xf32> to vector<16xf32>
    %80 = vector.shape_cast %79 : vector<16xf32> to vector<16x1xf32>
    %81 = vector.broadcast %80 : vector<16x1xf32> to vector<16x16xf32>
    %82 = arith.subf %78, %81 : vector<16x16xf32>
    %83 = math.exp %82 : vector<16x16xf32>
    %cst_24 = arith.constant dense<0.000000e+00> : vector<16xf32>
    %84 = vector.multi_reduction <add>, %83, %cst_24 [1] : vector<16x16xf32> to vector<16xf32>
    %85 = vector.shape_cast %84 : vector<16xf32> to vector<16x1xf32>
    %86 = tpu.reciprocal %85 {approx = true} : vector<16x1xf32> -> vector<16x1xf32>
    %87 = vector.broadcast %86 : vector<16x1xf32> to vector<16x16xf32>
    %88 = arith.mulf %83, %87 : vector<16x16xf32>
    %cst_25 = arith.constant dense<0.000000e+00> : vector<16x8xf32>
    %89 = tpu.matmul %88, %75, %cst_25 {dimension_numbers = #tpu.dot_dimension_numbers<[1], [1], [0], [0], [0, 0, 1, 0], [], []>} : vector<16x16xf32>, vector<8x16xf32>, vector<16x8xf32> -> vector<16x8xf32>
    %c16 = arith.constant 16 : index
    %c128_26 = arith.constant 128 : index
    %90 = vector.load %arg2[%c16, %c128_26] : memref<160x384xf32, #tpu.memory_space<vmem>>, vector<8x32xf32>
    %cst_27 = arith.constant dense<0.000000e+00> : vector<16x32xf32>
    %91 = tpu.matmul %89, %90, %cst_27 {dimension_numbers = #tpu.dot_dimension_numbers<[1], [0], [0], [1], [0, 0, 1, 1], [], []>} : vector<16x8xf32>, vector<8x32xf32>, vector<16x32xf32> -> vector<16x32xf32>
    %92 = arith.addf %72, %91 : vector<16x32xf32>
    %93 = vector.extract_strided_slice %33 {offsets = [24, 0], sizes = [8, 16], strides = [1, 1]} : vector<96x16xf32> to vector<8x16xf32>
    %94 = vector.extract_strided_slice %33 {offsets = [56, 0], sizes = [8, 16], strides = [1, 1]} : vector<96x16xf32> to vector<8x16xf32>
    %95 = vector.extract_strided_slice %33 {offsets = [88, 0], sizes = [8, 16], strides = [1, 1]} : vector<96x16xf32> to vector<8x16xf32>
    %96 = tpu.transpose %93, [1, 0] : vector<8x16xf32> -> vector<16x8xf32>
    %cst_28 = arith.constant dense<0.000000e+00> : vector<16x16xf32>
    %97 = tpu.matmul %96, %94, %cst_28 {dimension_numbers = #tpu.dot_dimension_numbers<[1], [0], [0], [1], [0, 0, 1, 1], [], []>} : vector<16x8xf32>, vector<8x16xf32>, vector<16x16xf32> -> vector<16x16xf32>
    %98 = arith.addf %97, %9 : vector<16x16xf32>
    %cst_29 = arith.constant dense<0xFF800000> : vector<16xf32>
    %99 = vector.multi_reduction <maximumf>, %98, %cst_29 [1] : vector<16x16xf32> to vector<16xf32>
    %100 = vector.shape_cast %99 : vector<16xf32> to vector<16x1xf32>
    %101 = vector.broadcast %100 : vector<16x1xf32> to vector<16x16xf32>
    %102 = arith.subf %98, %101 : vector<16x16xf32>
    %103 = math.exp %102 : vector<16x16xf32>
    %cst_30 = arith.constant dense<0.000000e+00> : vector<16xf32>
    %104 = vector.multi_reduction <add>, %103, %cst_30 [1] : vector<16x16xf32> to vector<16xf32>
    %105 = vector.shape_cast %104 : vector<16xf32> to vector<16x1xf32>
    %106 = tpu.reciprocal %105 {approx = true} : vector<16x1xf32> -> vector<16x1xf32>
    %107 = vector.broadcast %106 : vector<16x1xf32> to vector<16x16xf32>
    %108 = arith.mulf %103, %107 : vector<16x16xf32>
    %cst_31 = arith.constant dense<0.000000e+00> : vector<16x8xf32>
    %109 = tpu.matmul %108, %95, %cst_31 {dimension_numbers = #tpu.dot_dimension_numbers<[1], [1], [0], [0], [0, 0, 1, 0], [], []>} : vector<16x16xf32>, vector<8x16xf32>, vector<16x8xf32> -> vector<16x8xf32>
    %c24 = arith.constant 24 : index
    %c128_32 = arith.constant 128 : index
    %110 = vector.load %arg2[%c24, %c128_32] : memref<160x384xf32, #tpu.memory_space<vmem>>, vector<8x32xf32>
    %cst_33 = arith.constant dense<0.000000e+00> : vector<16x32xf32>
    %111 = tpu.matmul %109, %110, %cst_33 {dimension_numbers = #tpu.dot_dimension_numbers<[1], [0], [0], [1], [0, 0, 1, 1], [], []>} : vector<16x8xf32>, vector<8x32xf32>, vector<16x32xf32> -> vector<16x32xf32>
    %112 = arith.addf %92, %111 : vector<16x32xf32>
    %113 = arith.addf %0, %112 : vector<16x32xf32>
    %114 = vector.broadcast %6 : vector<1x32xf32> to vector<16x32xf32>
    %115 = arith.addf %113, %114 : vector<16x32xf32>
    %cst_34 = arith.constant dense<0.000000e+00> : vector<16xf32>
    %116 = vector.multi_reduction <add>, %115, %cst_34 [1] : vector<16x32xf32> to vector<16xf32>
    %117 = vector.shape_cast %116 : vector<16xf32> to vector<16x1xf32>
    %cst_35 = arith.constant 3.200000e+01 : f32
    %118 = vector.broadcast %cst_35 : f32 to vector<16x1xf32>
    %119 = arith.divf %117, %118 : vector<16x1xf32>
    %120 = vector.broadcast %119 : vector<16x1xf32> to vector<16x32xf32>
    %121 = arith.subf %115, %120 : vector<16x32xf32>
    %122 = arith.mulf %121, %121 : vector<16x32xf32>
    %cst_36 = arith.constant dense<0.000000e+00> : vector<16xf32>
    %123 = vector.multi_reduction <add>, %122, %cst_36 [1] : vector<16x32xf32> to vector<16xf32>
    %124 = vector.shape_cast %123 : vector<16xf32> to vector<16x1xf32>
    %cst_37 = arith.constant 3.200000e+01 : f32
    %125 = vector.broadcast %cst_37 : f32 to vector<16x1xf32>
    %126 = arith.divf %124, %125 : vector<16x1xf32>
    %127 = vector.broadcast %119 : vector<16x1xf32> to vector<16x32xf32>
    %128 = arith.subf %115, %127 : vector<16x32xf32>
    %cst_38 = arith.constant 9.99999974E-6 : f32
    %129 = vector.broadcast %cst_38 : f32 to vector<16x1xf32>
    %130 = arith.addf %126, %129 : vector<16x1xf32>
    %131 = math.rsqrt %130 : vector<16x1xf32>
    %132 = vector.broadcast %131 : vector<16x1xf32> to vector<16x32xf32>
    %133 = arith.mulf %128, %132 : vector<16x32xf32>
    %134 = vector.broadcast %4 : vector<1x32xf32> to vector<16x32xf32>
    %135 = arith.mulf %133, %134 : vector<16x32xf32>
    %136 = vector.broadcast %5 : vector<1x32xf32> to vector<16x32xf32>
    %137 = arith.addf %135, %136 : vector<16x32xf32>
    %c0_39 = arith.constant 0 : index
    %c256 = arith.constant 256 : index
    %138 = vector.load %arg2[%c0_39, %c256] : memref<160x384xf32, #tpu.memory_space<vmem>>, vector<32x128xf32>
    %c32 = arith.constant 32 : index
    %c128_40 = arith.constant 128 : index
    %139 = vector.load %arg2[%c32, %c128_40] : memref<160x384xf32, #tpu.memory_space<vmem>>, vector<128x32xf32>
    %cst_41 = arith.constant dense<0.000000e+00> : vector<16x128xf32>
    %140 = tpu.matmul %137, %138, %cst_41 {dimension_numbers = #tpu.dot_dimension_numbers<[1], [0], [0], [1], [0, 0, 1, 1], [], []>} : vector<16x32xf32>, vector<32x128xf32>, vector<16x128xf32> -> vector<16x128xf32>
    %141 = vector.broadcast %8 : vector<1x128xf32> to vector<16x128xf32>
    %142 = arith.addf %140, %141 : vector<16x128xf32>
    %cst_42 = arith.constant 0.000000e+00 : f32
    %143 = vector.broadcast %cst_42 : f32 to vector<16x128xf32>
    %144 = arith.maximumf %142, %143 : vector<16x128xf32>
    %cst_43 = arith.constant dense<0.000000e+00> : vector<16x32xf32>
    %145 = tpu.matmul %144, %139, %cst_43 {dimension_numbers = #tpu.dot_dimension_numbers<[1], [0], [0], [1], [0, 0, 1, 1], [], []>} : vector<16x128xf32>, vector<128x32xf32>, vector<16x32xf32> -> vector<16x32xf32>
    %146 = vector.broadcast %7 : vector<1x32xf32> to vector<16x32xf32>
    %147 = arith.addf %145, %146 : vector<16x32xf32>
    %148 = arith.addf %115, %147 : vector<16x32xf32>
    %c0_44 = arith.constant 0 : index
    %c0_45 = arith.constant 0 : index
    %149 = vector.load %arg3[%c0_44, %c0_45] : memref<16x32xf32, #tpu.memory_space<vmem>>, vector<16x32xf32>
    tpu.vector_store %arg3[%c0_44, %c0_45], %148 {strides = array<i32>} : memref<16x32xf32, #tpu.memory_space<vmem>>, vector<16x32xf32>,
    return
  }
  func.func @transform_0(%arg0: i32) -> (i32, i32) {
    %c0_i32 = arith.constant 0 : i32
    %c0_i32_0 = arith.constant 0 : i32
    %c0_i32_1 = arith.constant 0 : i32
    return %c0_i32, %c0_i32_0 : i32, i32
  }
  func.func @transform_1(%arg0: i32) -> (i32, i32) {
    %c0_i32 = arith.constant 0 : i32
    %c0_i32_0 = arith.constant 0 : i32
    %c0_i32_1 = arith.constant 0 : i32
    return %c0_i32, %c0_i32_0 : i32, i32
  }
  func.func @transform_2(%arg0: i32) -> (i32, i32) {
    %c0_i32 = arith.constant 0 : i32
    %c0_i32_0 = arith.constant 0 : i32
    %c0_i32_1 = arith.constant 0 : i32
    return %c0_i32, %c0_i32_0 : i32, i32
  }
}

</mosaic_0001>

<llo_original>
// kernel: block_forward.1
$region0: #{block_forward.1}
  #allocation0 [shape = 'u32[]', space=smem, size = 0x4, offset = 0x4, fixed_abs, tag = 'smem constant byte address 0x4 - core index']
  #allocation1 [shape = 'u32[144,128]{1,0:T(1,128)}', space=vmem, size = 0x12000, scoped, tag = 'internal scratch']
  %s0 = inlined_call_operand.hbm [shape: f32[16,32], index: 0, kind: input, shape index: {}]
  %s1 = inlined_call_operand.hbm [shape: f32[160,384], index: 1, kind: input, shape index: {}]
  %s2 = inlined_call_operand.hbm [shape: f32[16,32], index: 2, kind: output, shape index: {}]
  %s3 = sld [smem:[#allocation0]]
  $region26: #{block_forward.1} parent=0
    _
  %s5 = ssub.s32 1, %s3
  %s6 = scalar_select 0, %s5, %s3
  $region1: #{block_forward.1} parent=0
    #allocation2 [shape = 'u8[8192]{0}', space=vmem, size = 0x2000, scoped, tag = 'input window, operand 0, single buffered']
    #allocation3 [shape = 's32[1]{0}', space=sflag, size = 0x4, scoped, tag = 'scoped memory for block_forward.1']
    #allocation4 [shape = 's32[1]{0}', space=sflag, size = 0x4, scoped, tag = 'scoped memory for block_forward.1']
    #allocation5 [shape = 'u8[245760]{0}', space=vmem, size = 0x3c000, scoped, tag = 'input window, operand 1, single buffered']
    #allocation6 [shape = 's32[1]{0}', space=sflag, size = 0x4, scoped, tag = 'scoped memory for block_forward.1']
    #allocation7 [shape = 'u8[8192]{0}', space=vmem, size = 0x2000, scoped, tag = 'output window, operand 0, single buffered']
    %7 = vsyncpa [#allocation3], 0
    %8 = vsyncpa [#allocation6], 0
    %9 = vsyncpa [#allocation4], 0
    // Predicated region
    $region2: #{block_forward.1} parent=1 // pred_check
      _
    $region3: #{block_forward.1} parent=1 // pred_check_branch
      %11 = sbr.rel (0) target = $region5
    $region4: #{block_forward.1} parent=1 // pred_region
      %s13 = ssub.s32 256, 256
      %14 = vsyncadd [#allocation3], %s13
      %s15 = sshll.u32 [#allocation2], 4
      %s16 = int_to_ptr.vmem [resolvable:$true] %s15
      %21 = dma.hbm_to_vmem [thread:$0]  %s0, 256, %s16, [#allocation3], 128, 128, 8
    $region5: #{block_forward.1} parent=1 // pred_fallthru
      _
    // Predicated region
    $region6: #{block_forward.1} parent=1 // pred_check
      _
    $region7: #{block_forward.1} parent=1 // pred_check_branch
      %23 = sbr.rel (0) target = $region9
    $region8: #{block_forward.1} parent=1 // pred_region
      %s25 = ssub.s32 7680, 7680
      %26 = vsyncadd [#allocation6], %s25
      %s27 = sshll.u32 [#allocation5], 4
      %s28 = int_to_ptr.vmem [resolvable:$true] %s27
      %33 = dma.hbm_to_vmem [thread:$0]  %s1, 7680, %s28, [#allocation6], 384, 384, 24
    $region9: #{block_forward.1} parent=1 // pred_fallthru
      _
    // Predicated region
    $region10: #{block_forward.1} parent=1 // pred_check
      _
    $region11: #{block_forward.1} parent=1 // pred_check_branch
      %35 = sbr.rel (0) target = $region13
    $region12: #{block_forward.1} parent=1 // pred_region
      %36 = dma.done [#allocation3], 256
    $region13: #{block_forward.1} parent=1 // pred_fallthru
      _
    // Predicated region
    $region14: #{block_forward.1} parent=1 // pred_check
      _
    $region15: #{block_forward.1} parent=1 // pred_check_branch
      %38 = sbr.rel (0) target = $region17
    $region16: #{block_forward.1} parent=1 // pred_region
      %39 = dma.done [#allocation6], 7680
    $region17: #{block_forward.1} parent=1 // pred_fallthru
      _
    %v40 = vld [vmem:[#allocation2] sm:$0xff]
    %v41 = vld [vmem:[#allocation2 + $0x8] sm:$0xff]
    %v42 = vld [vmem:[#allocation5 + $0x120] sm:$0xff]
    %v43 = vld [vmem:[#allocation5 + $0x138] sm:$0xff]
    %v44 = vld [vmem:[#allocation5 + $0x150] sm:$0xff]
    %vm45 = vcmask 261120
    %v46 = vsel %vm45, %v40, 0.0
    %47 = vadd.xlane.f32.xlu0 %v46
    %v48 = vpop.xlane.xlu0 %47
    %v49 = vsel %vm45, %v41, 0.0
    %50 = vadd.xlane.f32.xlu0 %v49
    %v51 = vpop.xlane.xlu0 %50
    %v52 = vrcp.pop 32.0
    %v53 = vmul.f32 %v48, %v52
    %v54 = vmul.f32 %v51, %v52
    %v55 = vsub.f32 %v40, %v53
    %v56 = vsub.f32 %v41, %v54
    %v57 = vmul.f32 %v55, %v55
    %v58 = vmul.f32 %v56, %v56
    %v59 = vsel %vm45, %v57, 0.0
    %60 = vadd.xlane.f32.xlu0 %v59
    %v61 = vpop.xlane.xlu0 %60
    %v62 = vsel %vm45, %v58, 0.0
    %63 = vadd.xlane.f32.xlu0 %v62
    %v64 = vpop.xlane.xlu0 %63
    %v65 = vmul.f32 %v61, %v52
    %v66 = vmul.f32 %v64, %v52
    %v67 = vadd.f32 %v65, 1e-05
    %v68 = vadd.f32 %v66, 1e-05
    %v69 = vrsqrt.pop %v67
    %v70 = vrsqrt.pop %v68
    %v71 = vmul.f32 %v55, %v69
    %v72 = vmul.f32 %v56, %v70
    %v73 = vlaneseq
    %v74 = vshrl.u32 %v73, 7
    %v75 = vsub.s32 0, %v74
    %v76 = vrot.slane %v42, %v75
    %v77 = vmul.f32 %v71, %v76
    %v78 = vmul.f32 %v72, %v76
    %v79 = vlaneseq
    %v80 = vshrl.u32 %v79, 7
    %v81 = vsub.s32 1, %v80
    %v82 = vrot.slane %v42, %v81
    %v83 = vadd.f32 %v77, %v82
    %v84 = vadd.f32 %v78, %v82
    %v85 = vld [vmem:[#allocation5] sm:$0xff]
    %v86 = vld [vmem:[#allocation5 + $0x18] sm:$0xff]
    %v87 = vld [vmem:[#allocation5 + $0x30] sm:$0xff]
    %v88 = vld [vmem:[#allocation5 + $0x48] sm:$0xff]
    %v89 = vld [vmem:[#allocation5 + $0x60] sm:$0xff]
    %v90 = vld [vmem:[#allocation5 + $0x78] sm:$0xff]
    %v91 = vld [vmem:[#allocation5 + $0x90] sm:$0xff]
    %v92 = vld [vmem:[#allocation5 + $0xa8] sm:$0xff]
    %v93 = vld [vmem:[#allocation5 + $0xc0] sm:$0xff]
    %v94 = vld [vmem:[#allocation5 + $0xd8] sm:$0xff]
    %v95 = vld [vmem:[#allocation5 + $0xf0] sm:$0xff]
    %v96 = vld [vmem:[#allocation5 + $0x108] sm:$0xff]
    %v98 = vsel %vm45, %v85, 0
    %v101 = vsel %vm45, %v86, 0
    %v104 = vsel %vm45, %v87, 0
    %v107 = vsel %vm45, %v88, 0
    %v110 = vsel %vm45, %v89, 0
    %v113 = vsel %vm45, %v90, 0
    %v116 = vsel %vm45, %v91, 0
    %v119 = vsel %vm45, %v92, 0
    %v122 = vsel %vm45, %v93, 0
    %v125 = vsel %vm45, %v94, 0
    %v128 = vsel %vm45, %v95, 0
    %v131 = vsel %vm45, %v96, 0
    %v134 = vsel %vm45, %v83, 0
    %v137 = vsel %vm45, %v84, 0
    %139 = vmatprep.subr.mxu0 0.0
    %140 = vmatpush1.xpose.msra.mxu0 %v134
    %141 = vmatprep.subr.mxu0 0.0
    %142 = vmatpush1.xpose.msra.mxu0 %v137
    %143 = vmatprep.subr.mxu0 0.0
    %144 = vmatpush1.xpose.msra.mxu0 0.0
    %145 = vmatprep.subr.mxu0 0.0
    %146 = vmatpush1.xpose.msra.mxu0 0.0
    %147 = vmatprep.subr.mxu0 0.0
    %148 = vmatpush1.xpose.msra.mxu0 0.0
    %149 = vmatprep.subr.mxu0 0.0
    %150 = vmatpush1.xpose.msra.mxu0 0.0
    %151 = vmatprep.subr.mxu0 0.0
    %152 = vmatpush1.xpose.msra.mxu0 0.0
    %153 = vmatprep.subr.mxu0 0.0
    %154 = vmatpush1.xpose.msra.mxu0 0.0
    %155 = vmatprep.subr.mxu0 0.0
    %156 = vmatpush1.xpose.msra.mxu0 0.0
    %157 = vmatprep.subr.mxu0 0.0
    %158 = vmatpush1.xpose.msra.mxu0 0.0
    %159 = vmatprep.subr.mxu0 0.0
    %160 = vmatpush1.xpose.msra.mxu0 0.0
    %161 = vmatprep.subr.mxu0 0.0
    %162 = vmatpush1.xpose.msra.mxu0 0.0
    %163 = vmatprep.subr.mxu0 0.0
    %164 = vmatpush1.xpose.msra.mxu0 0.0
    %165 = vmatprep.subr.mxu0 0.0
    %166 = vmatpush1.xpose.msra.mxu0 0.0
    %167 = vmatprep.subr.mxu0 0.0
    %168 = vmatpush1.xpose.msra.mxu0 0.0
    %169 = vmatprep.subr.mxu0 0.0
    %170 = vmatpush1.xpose.msra.mxu0 0.0
    %171 = vmatprep.subr.mxu0 0.0
    %172 = vmatpush1.xpose.msra.mxu0 0.0
    %173 = vmatprep.subr.mxu0 0.0
    %174 = vmatpush1.xpose.msra.mxu0 0.0
    %175 = vmatprep.subr.mxu0 0.0
    %176 = vmatpush1.xpose.msra.mxu0 0.0
    %177 = vmatprep.subr.mxu0 0.0
    %178 = vmatpush1.xpose.msra.mxu0 0.0
    %179 = vmatprep.subr.mxu0 0.0
    %180 = vmatpush1.xpose.msra.mxu0 0.0
    %181 = vmatprep.subr.mxu0 0.0
    %182 = vmatpush1.xpose.msra.mxu0 0.0
    %183 = vmatprep.subr.mxu0 0.0
    %184 = vmatpush1.xpose.msra.mxu0 0.0
    %185 = vmatprep.subr.mxu0 0.0
    %186 = vmatpush1.xpose.msra.mxu0 0.0
    %187 = vmatprep.subr.mxu0 0.0
    %188 = vmatpush1.xpose.msra.mxu0 0.0
    %189 = vmatprep.subr.mxu0 0.0
    %190 = vmatpush1.xpose.msra.mxu0 0.0
    %191 = vmatprep.subr.mxu0 0.0
    %192 = vmatpush1.xpose.msra.mxu0 0.0
    %193 = vmatprep.subr.mxu0 0.0
    %194 = vmatpush1.xpose.msra.mxu0 0.0
    %195 = vmatprep.subr.mxu0 0.0
    %196 = vmatpush1.xpose.msra.mxu0 0.0
    %197 = vmatprep.subr.mxu0 0.0
    %198 = vmatpush1.xpose.msra.mxu0 0.0
    %199 = vmatprep.subr.mxu0 0.0
    %200 = vmatpush1.xpose.msra.mxu0 0.0
    %201 = vmatprep.subr.mxu0 0.0
    %202 = vmatpush1.xpose.msra.mxu0 0.0
    %203 = vmatprep.mubr.f32.mxu0 0.0
    %204 = vmatmul.mubr.f32.gmra.mrb[0].mxu0 %v98
    %v205 = vpop.f32.mrb[0].mxu0
    %v206 = vadd.f32 0.0, %v205
    %v207 = vpop.f32.mrb[0].mxu0
    %208 = vmatprep.mubr.f32.mxu0 0.0
    %209 = vmatmul.mubr.f32.gmra.mrb[0].mxu0 %v101
    %v210 = vpop.f32.mrb[0].mxu0
    %v211 = vadd.f32 0.0, %v210
    %v212 = vpop.f32.mrb[0].mxu0
    %213 = vmatprep.mubr.f32.mxu0 0.0
    %214 = vmatmul.mubr.f32.gmra.mrb[0].mxu0 %v104
    %v215 = vpop.f32.mrb[0].mxu0
    %v216 = vadd.f32 0.0, %v215
    %v217 = vpop.f32.mrb[0].mxu0
    %218 = vmatprep.mubr.f32.mxu0 0.0
    %219 = vmatmul.mubr.f32.gmra.mrb[0].mxu0 %v107
    %v220 = vpop.f32.mrb[0].mxu0
    %v221 = vadd.f32 0.0, %v220
    %v222 = vpop.f32.mrb[0].mxu0
    %223 = vmatprep.mubr.f32.mxu0 0.0
    %224 = vmatmul.mubr.f32.gmra.mrb[0].mxu0 %v110
    %v225 = vpop.f32.mrb[0].mxu0
    %v226 = vadd.f32 0.0, %v225
    %v227 = vpop.f32.mrb[0].mxu0
    %228 = vmatprep.mubr.f32.mxu0 0.0
    %229 = vmatmul.mubr.f32.gmra.mrb[0].mxu0 %v113
    %v230 = vpop.f32.mrb[0].mxu0
    %v231 = vadd.f32 0.0, %v230
    %v232 = vpop.f32.mrb[0].mxu0
    %233 = vmatprep.mubr.f32.mxu0 0.0
    %234 = vmatmul.mubr.f32.gmra.mrb[0].mxu0 %v116
    %v235 = vpop.f32.mrb[0].mxu0
    %v236 = vadd.f32 0.0, %v235
    %v237 = vpop.f32.mrb[0].mxu0
    %238 = vmatprep.mubr.f32.mxu0 0.0
    %239 = vmatmul.mubr.f32.gmra.mrb[0].mxu0 %v119
    %v240 = vpop.f32.mrb[0].mxu0
    %v241 = vadd.f32 0.0, %v240
    %v242 = vpop.f32.mrb[0].mxu0
    %243 = vmatprep.mubr.f32.mxu0 0.0
    %244 = vmatmul.mubr.f32.gmra.mrb[0].mxu0 %v122
    %v245 = vpop.f32.mrb[0].mxu0
    %v246 = vadd.f32 0.0, %v245
    %v247 = vpop.f32.mrb[0].mxu0
    %248 = vmatprep.mubr.f32.mxu0 0.0
    %249 = vmatmul.mubr.f32.gmra.mrb[0].mxu0 %v125
    %v250 = vpop.f32.mrb[0].mxu0
    %v251 = vadd.f32 0.0, %v250
    %v252 = vpop.f32.mrb[0].mxu0
    %253 = vmatprep.mubr.f32.mxu0 0.0
    %254 = vmatmul.mubr.f32.gmra.mrb[0].mxu0 %v128
    %v255 = vpop.f32.mrb[0].mxu0
    %v256 = vadd.f32 0.0, %v255
    %v257 = vpop.f32.mrb[0].mxu0
    %258 = vmatprep.mubr.f32.mxu0 0.0
    %259 = vmatmul.mubr.f32.gmra.mrb[0].mxu0 %v131
    %v260 = vpop.f32.mrb[0].mxu0
    %v261 = vadd.f32 0.0, %v260
    %v262 = vpop.f32.mrb[0].mxu0
    %263 = vdwg.mxu0
    %264 = vxpose.xlu0.b32.start [1/16] %v206, 128
    %265 = vxpose.xlu0.b32.cont [2/16] 0.0, 128
    %266 = vxpose.xlu0.b32.cont [3/16] 0.0, 128
    %267 = vxpose.xlu0.b32.cont [4/16] 0.0, 128
    %268 = vxpose.xlu0.b32.cont [5/16] 0.0, 128
    %269 = vxpose.xlu0.b32.cont [6/16] 0.0, 128
    %270 = vxpose.xlu0.b32.cont [7/16] 0.0, 128
    %271 = vxpose.xlu0.b32.cont [8/16] 0.0, 128
    %272 = vxpose.xlu0.b32.cont [9/16] 0.0, 128
    %273 = vxpose.xlu0.b32.cont [10/16] 0.0, 128
    %274 = vxpose.xlu0.b32.cont [11/16] 0.0, 128
    %275 = vxpose.xlu0.b32.cont [12/16] 0.0, 128
    %276 = vxpose.xlu0.b32.cont [13/16] 0.0, 128
    %277 = vxpose.xlu0.b32.cont [14/16] 0.0, 128
    %278 = vxpose.xlu0.b32.cont [15/16] 0.0, 128
    %279 = vxpose.xlu0.b32.end [16/16] 0.0, 128
    %v280 = vpop.trf.xlu0
    %v281 = vpop.trf.xlu0
    %v282 = vpop.trf.xlu0
    %v283 = vpop.trf.xlu0
    %v284 = vpop.trf.xlu0
    %v285 = vpop.trf.xlu0
    %v286 = vpop.trf.xlu0
    %v287 = vpop.trf.xlu0
    %v288 = vpop.trf.xlu0
    %v289 = vpop.trf.xlu0
    %v290 = vpop.trf.xlu0
    %v291 = vpop.trf.xlu0
    %v292 = vpop.trf.xlu0
    %v293 = vpop.trf.xlu0
    %v294 = vpop.trf.xlu0
    %v295 = vpop.trf.xlu0
    %vm296 = vcmask 64512
    %v298 = vsel %vm296, %v280, 0
    %v301 = vsel %vm296, %v281, 0
    %303 = vmatprep.subr.mxu0 0.0
    %304 = vmatpush1.msra.mxu0 %v226
    %305 = vmatprep.subr.mxu0 0.0
    %306 = vmatpush1.msra.mxu0 0.0
    %307 = vmatprep.subr.mxu0 0.0
    %308 = vmatpush1.msra.mxu0 0.0
    %309 = vmatprep.subr.mxu0 0.0
    %310 = vmatpush1.msra.mxu0 0.0
    %311 = vmatprep.subr.mxu0 0.0
    %312 = vmatpush1.msra.mxu0 0.0
    %313 = vmatprep.subr.mxu0 0.0
    %314 = vmatpush1.msra.mxu0 0.0
    %315 = vmatprep.subr.mxu0 0.0
    %316 = vmatpush1.msra.mxu0 0.0
    %317 = vmatprep.subr.mxu0 0.0
    %318 = vmatpush1.msra.mxu0 0.0
    %319 = vmatprep.subr.mxu0 0.0
    %320 = vmatpush1.msra.mxu0 0.0
    %321 = vmatprep.subr.mxu0 0.0
    %322 = vmatpush1.msra.mxu0 0.0
    %323 = vmatprep.subr.mxu0 0.0
    %324 = vmatpush1.msra.mxu0 0.0
    %325 = vmatprep.subr.mxu0 0.0
    %326 = vmatpush1.msra.mxu0 0.0
    %327 = vmatprep.subr.mxu0 0.0
    %328 = vmatpush1.msra.mxu0 0.0
    %329 = vmatprep.subr.mxu0 0.0
    %330 = vmatpush1.msra.mxu0 0.0
    %331 = vmatprep.subr.mxu0 0.0
    %332 = vmatpush1.msra.mxu0 0.0
    %333 = vmatprep.subr.mxu0 0.0
    %334 = vmatpush1.msra.mxu0 0.0
    %335 = vmatprep.subr.mxu0 0.0
    %336 = vmatpush1.msra.mxu0 0.0
    %337 = vmatprep.subr.mxu0 0.0
    %338 = vmatpush1.msra.mxu0 0.0
    %339 = vmatprep.subr.mxu0 0.0
    %340 = vmatpush1.msra.mxu0 0.0
    %341 = vmatprep.subr.mxu0 0.0
    %342 = vmatpush1.msra.mxu0 0.0
    %343 = vmatprep.subr.mxu0 0.0
    %344 = vmatpush1.msra.mxu0 0.0
    %345 = vmatprep.subr.mxu0 0.0
    %346 = vmatpush1.msra.mxu0 0.0
    %347 = vmatprep.subr.mxu0 0.0
    %348 = vmatpush1.msra.mxu0 0.0
    %349 = vmatprep.subr.mxu0 0.0
    %350 = vmatpush1.msra.mxu0 0.0
    %351 = vmatprep.subr.mxu0 0.0
    %352 = vmatpush1.msra.mxu0 0.0
    %353 = vmatprep.subr.mxu0 0.0
    %354 = vmatpush1.msra.mxu0 0.0
    %355 = vmatprep.subr.mxu0 0.0
    %356 = vmatpush1.msra.mxu0 0.0
    %357 = vmatprep.subr.mxu0 0.0
    %358 = vmatpush1.msra.mxu0 0.0
    %359 = vmatprep.subr.mxu0 0.0
    %360 = vmatpush1.msra.mxu0 0.0
    %361 = vmatprep.subr.mxu0 0.0
    %362 = vmatpush1.msra.mxu0 0.0
    %363 = vmatprep.subr.mxu0 0.0
    %364 = vmatpush1.msra.mxu0 0.0
    %365 = vmatprep.subr.mxu0 0.0
    %366 = vmatpush1.msra.mxu0 0.0
    %367 = vmatprep.mubr.f32.mxu0 0.0
    %368 = vmatmul.mubr.f32.gmra.mrb[0].mxu0 %v298
    %v369 = vpop.f32.mrb[0].mxu0
    %v370 = vadd.f32 %v43, %v369
    %v371 = vpop.f32.mrb[0].mxu0
    %372 = vmatprep.mubr.f32.mxu0 0.0
    %373 = vmatmul.mubr.f32.gmra.mrb[0].mxu0 %v301
    %v374 = vpop.f32.mrb[0].mxu0
    %v375 = vadd.f32 %v44, %v374
    %v376 = vpop.f32.mrb[0].mxu0
    %377 = vdwg.mxu0
    %vm378 = vcmask 130048
    %v379 = vsel %vm378, %v370, -inf
    %380 = vmax.xlane.f32.xlu0 %v379
    %v381 = vpop.xlane.xlu0 %380
    %v382 = vsel %vm378, %v375, -inf
    %383 = vmax.xlane.f32.xlu0 %v382
    %v384 = vpop.xlane.xlu0 %383
    %v385 = vsub.f32 %v370, %v381
    %v386 = vsub.f32 %v375, %v384
    %v387 = vmul.f32 %v385, 1.442695
    %v388 = vpow.pop %v387
    %v389 = vmul.f32 %v386, 1.442695
    %v390 = vpow.pop %v389
    %v391 = vsel %vm378, %v388, 0.0
    %392 = vadd.xlane.f32.xlu0 %v391
    %v393 = vpop.xlane.xlu0 %392
    %v394 = vsel %vm378, %v390, 0.0
    %395 = vadd.xlane.f32.xlu0 %v394
    %v396 = vpop.xlane.xlu0 %395
    %v397 = vrcp.pop %v393
    %v398 = vrcp.pop %v396
    %v399 = vmul.f32 %v388, %v397
    %v400 = vmul.f32 %v390, %v398
    %v402 = vsel %vm378, %v399, 0
    %v405 = vsel %vm378, %v400, 0
    %v408 = vsel %vm378, %v246, 0
    %410 = vmatprep.subr.mxu0 0.0
    %411 = vmatpush1.xpose.msra.mxu0 %v408
    %412 = vmatprep.subr.mxu0 0.0
    %413 = vmatpush1.xpose.msra.mxu0 0.0
    %414 = vmatprep.subr.mxu0 0.0
    %415 = vmatpush1.xpose.msra.mxu0 0.0
    %416 = vmatprep.subr.mxu0 0.0
    %417 = vmatpush1.xpose.msra.mxu0 0.0
    %418 = vmatprep.subr.mxu0 0.0
    %419 = vmatpush1.xpose.msra.mxu0 0.0
    %420 = vmatprep.subr.mxu0 0.0
    %421 = vmatpush1.xpose.msra.mxu0 0.0
    %422 = vmatprep.subr.mxu0 0.0
    %423 = vmatpush1.xpose.msra.mxu0 0.0
    %424 = vmatprep.subr.mxu0 0.0
    %425 = vmatpush1.xpose.msra.mxu0 0.0
    %426 = vmatprep.subr.mxu0 0.0
    %427 = vmatpush1.xpose.msra.mxu0 0.0
    %428 = vmatprep.subr.mxu0 0.0
    %429 = vmatpush1.xpose.msra.mxu0 0.0
    %430 = vmatprep.subr.mxu0 0.0
    %431 = vmatpush1.xpose.msra.mxu0 0.0
    %432 = vmatprep.subr.mxu0 0.0
    %433 = vmatpush1.xpose.msra.mxu0 0.0
    %434 = vmatprep.subr.mxu0 0.0
    %435 = vmatpush1.xpose.msra.mxu0 0.0
    %436 = vmatprep.subr.mxu0 0.0
    %437 = vmatpush1.xpose.msra.mxu0 0.0
    %438 = vmatprep.subr.mxu0 0.0
    %439 = vmatpush1.xpose.msra.mxu0 0.0
    %440 = vmatprep.subr.mxu0 0.0
    %441 = vmatpush1.xpose.msra.mxu0 0.0
    %442 = vmatprep.subr.mxu0 0.0
    %443 = vmatpush1.xpose.msra.mxu0 0.0
    %444 = vmatprep.subr.mxu0 0.0
    %445 = vmatpush1.xpose.msra.mxu0 0.0
    %446 = vmatprep.subr.mxu0 0.0
    %447 = vmatpush1.xpose.msra.mxu0 0.0
    %448 = vmatprep.subr.mxu0 0.0
    %449 = vmatpush1.xpose.msra.mxu0 0.0
    %450 = vmatprep.subr.mxu0 0.0
    %451 = vmatpush1.xpose.msra.mxu0 0.0
    %452 = vmatprep.subr.mxu0 0.0
    %453 = vmatpush1.xpose.msra.mxu0 0.0
    %454 = vmatprep.subr.mxu0 0.0
    %455 = vmatpush1.xpose.msra.mxu0 0.0
    %456 = vmatprep.subr.mxu0 0.0
    %457 = vmatpush1.xpose.msra.mxu0 0.0
    %458 = vmatprep.subr.mxu0 0.0
    %459 = vmatpush1.xpose.msra.mxu0 0.0
    %460 = vmatprep.subr.mxu0 0.0
    %461 = vmatpush1.xpose.msra.mxu0 0.0
    %462 = vmatprep.subr.mxu0 0.0
    %463 = vmatpush1.xpose.msra.mxu0 0.0
    %464 = vmatprep.subr.mxu0 0.0
    %465 = vmatpush1.xpose.msra.mxu0 0.0
    %466 = vmatprep.subr.mxu0 0.0
    %467 = vmatpush1.xpose.msra.mxu0 0.0
    %468 = vmatprep.subr.mxu0 0.0
    %469 = vmatpush1.xpose.msra.mxu0 0.0
    %470 = vmatprep.subr.mxu0 0.0
    %471 = vmatpush1.xpose.msra.mxu0 0.0
    %472 = vmatprep.subr.mxu0 0.0
    %473 = vmatpush1.xpose.msra.mxu0 0.0
    %474 = vmatprep.mubr.f32.mxu0 0.0
    %475 = vmatmul.mubr.f32.gmra.mrb[0].mxu0 %v402
    %v476 = vpop.f32.mrb[0].mxu0
    %v477 = vadd.f32 0.0, %v476
    %v478 = vpop.f32.mrb[0].mxu0
    %479 = vmatprep.mubr.f32.mxu0 0.0
    %480 = vmatmul.mubr.f32.gmra.mrb[0].mxu0 %v405
    %v481 = vpop.f32.mrb[0].mxu0
    %v482 = vadd.f32 0.0, %v481
    %v483 = vpop.f32.mrb[0].mxu0
    %484 = vdwg.mxu0
    %v485 = vld [vmem:[#allocation5 + $0x8] sm:$0xff]
    %486 = vxpose.xlu0.b32.start [1/16] %v211, 128
    %487 = vxpose.xlu0.b32.cont [2/16] 0.0, 128
    %488 = vxpose.xlu0.b32.cont [3/16] 0.0, 128
    %489 = vxpose.xlu0.b32.cont [4/16] 0.0, 128
    %490 = vxpose.xlu0.b32.cont [5/16] 0.0, 128
    %491 = vxpose.xlu0.b32.cont [6/16] 0.0, 128
    %492 = vxpose.xlu0.b32.cont [7/16] 0.0, 128
    %493 = vxpose.xlu0.b32.cont [8/16] 0.0, 128
    %494 = vxpose.xlu0.b32.cont [9/16] 0.0, 128
    %495 = vxpose.xlu0.b32.cont [10/16] 0.0, 128
    %496 = vxpose.xlu0.b32.cont [11/16] 0.0, 128
    %497 = vxpose.xlu0.b32.cont [12/16] 0.0, 128
    %498 = vxpose.xlu0.b32.cont [13/16] 0.0, 128
    %499 = vxpose.xlu0.b32.cont [14/16] 0.0, 128
    %500 = vxpose.xlu0.b32.cont [15/16] 0.0, 128
    %501 = vxpose.xlu0.b32.end [16/16] 0.0, 128
    %v502 = vpop.trf.xlu0
    %v503 = vpop.trf.xlu0
    %v504 = vpop.trf.xlu0
    %v505 = vpop.trf.xlu0
    %v506 = vpop.trf.xlu0
    %v507 = vpop.trf.xlu0
    %v508 = vpop.trf.xlu0
    %v509 = vpop.trf.xlu0
    %v510 = vpop.trf.xlu0
    %v511 = vpop.trf.xlu0
    %v512 = vpop.trf.xlu0
    %v513 = vpop.trf.xlu0
    %v514 = vpop.trf.xlu0
    %v515 = vpop.trf.xlu0
    %v516 = vpop.trf.xlu0
    %v517 = vpop.trf.xlu0
    %v519 = vsel %vm296, %v502, 0
    %v522 = vsel %vm296, %v503, 0
    %524 = vmatprep.subr.mxu0 0.0
    %525 = vmatpush1.msra.mxu0 %v231
    %526 = vmatprep.subr.mxu0 0.0
    %527 = vmatpush1.msra.mxu0 0.0
    %528 = vmatprep.subr.mxu0 0.0
    %529 = vmatpush1.msra.mxu0 0.0
    %530 = vmatprep.subr.mxu0 0.0
    %531 = vmatpush1.msra.mxu0 0.0
    %532 = vmatprep.subr.mxu0 0.0
    %533 = vmatpush1.msra.mxu0 0.0
    %534 = vmatprep.subr.mxu0 0.0
    %535 = vmatpush1.msra.mxu0 0.0
    %536 = vmatprep.subr.mxu0 0.0
    %537 = vmatpush1.msra.mxu0 0.0
    %538 = vmatprep.subr.mxu0 0.0
    %539 = vmatpush1.msra.mxu0 0.0
    %540 = vmatprep.subr.mxu0 0.0
    %541 = vmatpush1.msra.mxu0 0.0
    %542 = vmatprep.subr.mxu0 0.0
    %543 = vmatpush1.msra.mxu0 0.0
    %544 = vmatprep.subr.mxu0 0.0
    %545 = vmatpush1.msra.mxu0 0.0
    %546 = vmatprep.subr.mxu0 0.0
    %547 = vmatpush1.msra.mxu0 0.0
    %548 = vmatprep.subr.mxu0 0.0
    %549 = vmatpush1.msra.mxu0 0.0
    %550 = vmatprep.subr.mxu0 0.0
    %551 = vmatpush1.msra.mxu0 0.0
    %552 = vmatprep.subr.mxu0 0.0
    %553 = vmatpush1.msra.mxu0 0.0
    %554 = vmatprep.subr.mxu0 0.0
    %555 = vmatpush1.msra.mxu0 0.0
    %556 = vmatprep.subr.mxu0 0.0
    %557 = vmatpush1.msra.mxu0 0.0
    %558 = vmatprep.subr.mxu0 0.0
    %559 = vmatpush1.msra.mxu0 0.0
    %560 = vmatprep.subr.mxu0 0.0
    %561 = vmatpush1.msra.mxu0 0.0
    %562 = vmatprep.subr.mxu0 0.0
    %563 = vmatpush1.msra.mxu0 0.0
    %564 = vmatprep.subr.mxu0 0.0
    %565 = vmatpush1.msra.mxu0 0.0
    %566 = vmatprep.subr.mxu0 0.0
    %567 = vmatpush1.msra.mxu0 0.0
    %568 = vmatprep.subr.mxu0 0.0
    %569 = vmatpush1.msra.mxu0 0.0
    %570 = vmatprep.subr.mxu0 0.0
    %571 = vmatpush1.msra.mxu0 0.0
    %572 = vmatprep.subr.mxu0 0.0
    %573 = vmatpush1.msra.mxu0 0.0
    %574 = vmatprep.subr.mxu0 0.0
    %575 = vmatpush1.msra.mxu0 0.0
    %576 = vmatprep.subr.mxu0 0.0
    %577 = vmatpush1.msra.mxu0 0.0
    %578 = vmatprep.subr.mxu0 0.0
    %579 = vmatpush1.msra.mxu0 0.0
    %580 = vmatprep.subr.mxu0 0.0
    %581 = vmatpush1.msra.mxu0 0.0
    %582 = vmatprep.subr.mxu0 0.0
    %583 = vmatpush1.msra.mxu0 0.0
    %584 = vmatprep.subr.mxu0 0.0
    %585 = vmatpush1.msra.mxu0 0.0
    %586 = vmatprep.subr.mxu0 0.0
    %587 = vmatpush1.msra.mxu0 0.0
    %588 = vmatprep.mubr.f32.mxu0 0.0
    %589 = vmatmul.mubr.f32.gmra.mrb[0].mxu0 %v519
    %v590 = vpop.f32.mrb[0].mxu0
    %v591 = vadd.f32 %v43, %v590
    %v592 = vpop.f32.mrb[0].mxu0
    %593 = vmatprep.mubr.f32.mxu0 0.0
    %594 = vmatmul.mubr.f32.gmra.mrb[0].mxu0 %v522
    %v595 = vpop.f32.mrb[0].mxu0
    %v596 = vadd.f32 %v44, %v595
    %v597 = vpop.f32.mrb[0].mxu0
    %598 = vdwg.mxu0
    %v599 = vsel %vm378, %v591, -inf
    %600 = vmax.xlane.f32.xlu0 %v599
    %v601 = vpop.xlane.xlu0 %600
    %v602 = vsel %vm378, %v596, -inf
    %603 = vmax.xlane.f32.xlu0 %v602
    %v604 = vpop.xlane.xlu0 %603
    %v605 = vsub.f32 %v591, %v601
    %v606 = vsub.f32 %v596, %v604
    %v607 = vmul.f32 %v605, 1.442695
    %v608 = vpow.pop %v607
    %v609 = vmul.f32 %v606, 1.442695
    %v610 = vpow.pop %v609
    %v611 = vsel %vm378, %v608, 0.0
    %612 = vadd.xlane.f32.xlu0 %v611
    %v613 = vpop.xlane.xlu0 %612
    %v614 = vsel %vm378, %v610, 0.0
    %615 = vadd.xlane.f32.xlu0 %v614
    %v616 = vpop.xlane.xlu0 %615
    %v617 = vrcp.pop %v613
    %v618 = vrcp.pop %v616
    %v619 = vmul.f32 %v608, %v617
    %v620 = vmul.f32 %v610, %v618
    %v622 = vsel %vm378, %v619, 0
    %v625 = vsel %vm378, %v620, 0
    %v628 = vsel %vm378, %v251, 0
    %630 = vmatprep.subr.mxu0 0.0
    %631 = vmatpush1.xpose.msra.mxu0 %v628
    %632 = vmatprep.subr.mxu0 0.0
    %633 = vmatpush1.xpose.msra.mxu0 0.0
    %634 = vmatprep.subr.mxu0 0.0
    %635 = vmatpush1.xpose.msra.mxu0 0.0
    %636 = vmatprep.subr.mxu0 0.0
    %637 = vmatpush1.xpose.msra.mxu0 0.0
    %638 = vmatprep.subr.mxu0 0.0
    %639 = vmatpush1.xpose.msra.mxu0 0.0
    %640 = vmatprep.subr.mxu0 0.0
    %641 = vmatpush1.xpose.msra.mxu0 0.0
    %642 = vmatprep.subr.mxu0 0.0
    %643 = vmatpush1.xpose.msra.mxu0 0.0
    %644 = vmatprep.subr.mxu0 0.0
    %645 = vmatpush1.xpose.msra.mxu0 0.0
    %646 = vmatprep.subr.mxu0 0.0
    %647 = vmatpush1.xpose.msra.mxu0 0.0
    %648 = vmatprep.subr.mxu0 0.0
    %649 = vmatpush1.xpose.msra.mxu0 0.0
    %650 = vmatprep.subr.mxu0 0.0
    %651 = vmatpush1.xpose.msra.mxu0 0.0
    %652 = vmatprep.subr.mxu0 0.0
    %653 = vmatpush1.xpose.msra.mxu0 0.0
    %654 = vmatprep.subr.mxu0 0.0
    %655 = vmatpush1.xpose.msra.mxu0 0.0
    %656 = vmatprep.subr.mxu0 0.0
    %657 = vmatpush1.xpose.msra.mxu0 0.0
    %658 = vmatprep.subr.mxu0 0.0
    %659 = vmatpush1.xpose.msra.mxu0 0.0
    %660 = vmatprep.subr.mxu0 0.0
    %661 = vmatpush1.xpose.msra.mxu0 0.0
    %662 = vmatprep.subr.mxu0 0.0
    %663 = vmatpush1.xpose.msra.mxu0 0.0
    %664 = vmatprep.subr.mxu0 0.0
    %665 = vmatpush1.xpose.msra.mxu0 0.0
    %666 = vmatprep.subr.mxu0 0.0
    %667 = vmatpush1.xpose.msra.mxu0 0.0
    %668 = vmatprep.subr.mxu0 0.0
    %669 = vmatpush1.xpose.msra.mxu0 0.0
    %670 = vmatprep.subr.mxu0 0.0
    %671 = vmatpush1.xpose.msra.mxu0 0.0
    %672 = vmatprep.subr.mxu0 0.0
    %673 = vmatpush1.xpose.msra.mxu0 0.0
    %674 = vmatprep.subr.mxu0 0.0
    %675 = vmatpush1.xpose.msra.mxu0 0.0
    %676 = vmatprep.subr.mxu0 0.0
    %677 = vmatpush1.xpose.msra.mxu0 0.0
    %678 = vmatprep.subr.mxu0 0.0
    %679 = vmatpush1.xpose.msra.mxu0 0.0
    %680 = vmatprep.subr.mxu0 0.0
    %681 = vmatpush1.xpose.msra.mxu0 0.0
    %682 = vmatprep.subr.mxu0 0.0
    %683 = vmatpush1.xpose.msra.mxu0 0.0
    %684 = vmatprep.subr.mxu0 0.0
    %685 = vmatpush1.xpose.msra.mxu0 0.0
    %686 = vmatprep.subr.mxu0 0.0
    %687 = vmatpush1.xpose.msra.mxu0 0.0
    %688 = vmatprep.subr.mxu0 0.0
    %689 = vmatpush1.xpose.msra.mxu0 0.0
    %690 = vmatprep.subr.mxu0 0.0
    %691 = vmatpush1.xpose.msra.mxu0 0.0
    %692 = vmatprep.subr.mxu0 0.0
    %693 = vmatpush1.xpose.msra.mxu0 0.0
    %694 = vmatprep.mubr.f32.mxu0 0.0
    %695 = vmatmul.mubr.f32.gmra.mrb[0].mxu0 %v622
    %v696 = vpop.f32.mrb[0].mxu0
    %v697 = vadd.f32 0.0, %v696
    %v698 = vpop.f32.mrb[0].mxu0
    %699 = vmatprep.mubr.f32.mxu0 0.0
    %700 = vmatmul.mubr.f32.gmra.mrb[0].mxu0 %v625
    %v701 = vpop.f32.mrb[0].mxu0
    %v702 = vadd.f32 0.0, %v701
    %v703 = vpop.f32.mrb[0].mxu0
    %704 = vdwg.mxu0
    %v705 = vld [vmem:[#allocation5 + $0x20] sm:$0xff]
    %v707 = vsel %vm296, %v697, 0
    %v710 = vsel %vm296, %v702, 0
    %712 = vmatprep.subr.mxu0 0.0
    %713 = vmatpush1.msra.mxu0 %v705
    %714 = vmatprep.subr.mxu0 0.0
    %715 = vmatpush1.msra.mxu0 0.0
    %716 = vmatprep.subr.mxu0 0.0
    %717 = vmatpush1.msra.mxu0 0.0
    %718 = vmatprep.subr.mxu0 0.0
    %719 = vmatpush1.msra.mxu0 0.0
    %720 = vmatprep.subr.mxu0 0.0
    %721 = vmatpush1.msra.mxu0 0.0
    %722 = vmatprep.subr.mxu0 0.0
    %723 = vmatpush1.msra.mxu0 0.0
    %724 = vmatprep.subr.mxu0 0.0
    %725 = vmatpush1.msra.mxu0 0.0
    %726 = vmatprep.subr.mxu0 0.0
    %727 = vmatpush1.msra.mxu0 0.0
    %728 = vmatprep.subr.mxu0 0.0
    %729 = vmatpush1.msra.mxu0 0.0
    %730 = vmatprep.subr.mxu0 0.0
    %731 = vmatpush1.msra.mxu0 0.0
    %732 = vmatprep.subr.mxu0 0.0
    %733 = vmatpush1.msra.mxu0 0.0
    %734 = vmatprep.subr.mxu0 0.0
    %735 = vmatpush1.msra.mxu0 0.0
    %736 = vmatprep.subr.mxu0 0.0
    %737 = vmatpush1.msra.mxu0 0.0
    %738 = vmatprep.subr.mxu0 0.0
    %739 = vmatpush1.msra.mxu0 0.0
    %740 = vmatprep.subr.mxu0 0.0
    %741 = vmatpush1.msra.mxu0 0.0
    %742 = vmatprep.subr.mxu0 0.0
    %743 = vmatpush1.msra.mxu0 0.0
    %744 = vmatprep.subr.mxu0 0.0
    %745 = vmatpush1.msra.mxu0 0.0
    %746 = vmatprep.subr.mxu0 0.0
    %747 = vmatpush1.msra.mxu0 0.0
    %748 = vmatprep.subr.mxu0 0.0
    %749 = vmatpush1.msra.mxu0 0.0
    %750 = vmatprep.subr.mxu0 0.0
    %751 = vmatpush1.msra.mxu0 0.0
    %752 = vmatprep.subr.mxu0 0.0
    %753 = vmatpush1.msra.mxu0 0.0
    %754 = vmatprep.subr.mxu0 0.0
    %755 = vmatpush1.msra.mxu0 0.0
    %756 = vmatprep.subr.mxu0 0.0
    %757 = vmatpush1.msra.mxu0 0.0
    %758 = vmatprep.subr.mxu0 0.0
    %759 = vmatpush1.msra.mxu0 0.0
    %760 = vmatprep.subr.mxu0 0.0
    %761 = vmatpush1.msra.mxu0 0.0
    %762 = vmatprep.subr.mxu0 0.0
    %763 = vmatpush1.msra.mxu0 0.0
    %764 = vmatprep.subr.mxu0 0.0
    %765 = vmatpush1.msra.mxu0 0.0
    %766 = vmatprep.subr.mxu0 0.0
    %767 = vmatpush1.msra.mxu0 0.0
    %768 = vmatprep.subr.mxu0 0.0
    %769 = vmatpush1.msra.mxu0 0.0
    %770 = vmatprep.subr.mxu0 0.0
    %771 = vmatpush1.msra.mxu0 0.0
    %772 = vmatprep.subr.mxu0 0.0
    %773 = vmatpush1.msra.mxu0 0.0
    %774 = vmatprep.subr.mxu0 0.0
    %775 = vmatpush1.msra.mxu0 0.0
    %776 = vmatprep.mubr.f32.mxu0 0.0
    %777 = vmatmul.mubr.f32.gmra.mrb[0].mxu0 %v707
    %v778 = vpop.f32.mrb[0].mxu0
    %v779 = vadd.f32 0.0, %v778
    %v780 = vpop.f32.mrb[0].mxu0
    %781 = vmatprep.mubr.f32.mxu0 0.0
    %782 = vmatmul.mubr.f32.gmra.mrb[0].mxu0 %v710
    %v783 = vpop.f32.mrb[0].mxu0
    %v784 = vadd.f32 0.0, %v783
    %v785 = vpop.f32.mrb[0].mxu0
    %786 = vdwg.mxu0
    %v788 = vsel %vm296, %v477, 0
    %v791 = vsel %vm296, %v482, 0
    %793 = vmatprep.subr.mxu0 0.0
    %794 = vmatpush1.msra.mxu0 %v485
    %795 = vmatprep.subr.mxu0 0.0
    %796 = vmatpush1.msra.mxu0 0.0
    %797 = vmatprep.subr.mxu0 0.0
    %798 = vmatpush1.msra.mxu0 0.0
    %799 = vmatprep.subr.mxu0 0.0
    %800 = vmatpush1.msra.mxu0 0.0
    %801 = vmatprep.subr.mxu0 0.0
    %802 = vmatpush1.msra.mxu0 0.0
    %803 = vmatprep.subr.mxu0 0.0
    %804 = vmatpush1.msra.mxu0 0.0
    %805 = vmatprep.subr.mxu0 0.0
    %806 = vmatpush1.msra.mxu0 0.0
    %807 = vmatprep.subr.mxu0 0.0
    %808 = vmatpush1.msra.mxu0 0.0
    %809 = vmatprep.subr.mxu0 0.0
    %810 = vmatpush1.msra.mxu0 0.0
    %811 = vmatprep.subr.mxu0 0.0
    %812 = vmatpush1.msra.mxu0 0.0
    %813 = vmatprep.subr.mxu0 0.0
    %814 = vmatpush1.msra.mxu0 0.0
    %815 = vmatprep.subr.mxu0 0.0
    %816 = vmatpush1.msra.mxu0 0.0
    %817 = vmatprep.subr.mxu0 0.0
    %818 = vmatpush1.msra.mxu0 0.0
    %819 = vmatprep.subr.mxu0 0.0
    %820 = vmatpush1.msra.mxu0 0.0
    %821 = vmatprep.subr.mxu0 0.0
    %822 = vmatpush1.msra.mxu0 0.0
    %823 = vmatprep.subr.mxu0 0.0
    %824 = vmatpush1.msra.mxu0 0.0
    %825 = vmatprep.subr.mxu0 0.0
    %826 = vmatpush1.msra.mxu0 0.0
    %827 = vmatprep.subr.mxu0 0.0
    %828 = vmatpush1.msra.mxu0 0.0
    %829 = vmatprep.subr.mxu0 0.0
    %830 = vmatpush1.msra.mxu0 0.0
    %831 = vmatprep.subr.mxu0 0.0
    %832 = vmatpush1.msra.mxu0 0.0
    %833 = vmatprep.subr.mxu0 0.0
    %834 = vmatpush1.msra.mxu0 0.0
    %835 = vmatprep.subr.mxu0 0.0
    %836 = vmatpush1.msra.mxu0 0.0
    %837 = vmatprep.subr.mxu0 0.0
    %838 = vmatpush1.msra.mxu0 0.0
    %839 = vmatprep.subr.mxu0 0.0
    %840 = vmatpush1.msra.mxu0 0.0
    %841 = vmatprep.subr.mxu0 0.0
    %842 = vmatpush1.msra.mxu0 0.0
    %843 = vmatprep.subr.mxu0 0.0
    %844 = vmatpush1.msra.mxu0 0.0
    %845 = vmatprep.subr.mxu0 0.0
    %846 = vmatpush1.msra.mxu0 0.0
    %847 = vmatprep.subr.mxu0 0.0
    %848 = vmatpush1.msra.mxu0 0.0
    %849 = vmatprep.subr.mxu0 0.0
    %850 = vmatpush1.msra.mxu0 0.0
    %851 = vmatprep.subr.mxu0 0.0
    %852 = vmatpush1.msra.mxu0 0.0
    %853 = vmatprep.subr.mxu0 0.0
    %854 = vmatpush1.msra.mxu0 0.0
    %855 = vmatprep.subr.mxu0 0.0
    %856 = vmatpush1.msra.mxu0 0.0
    %857 = vmatprep.mubr.f32.mxu0 0.0
    %858 = vmatmul.mubr.f32.gmra.mrb[0].mxu0 %v788
    %v859 = vpop.f32.mrb[0].mxu0
    %v860 = vadd.f32 %v779, %v859
    %v861 = vpop.f32.mrb[0].mxu0
    %862 = vmatprep.mubr.f32.mxu0 0.0
    %863 = vmatmul.mubr.f32.gmra.mrb[0].mxu0 %v791
    %v864 = vpop.f32.mrb[0].mxu0
    %v865 = vadd.f32 %v784, %v864
    %v866 = vpop.f32.mrb[0].mxu0
    %867 = vdwg.mxu0
    %868 = vxpose.xlu0.b32.start [1/16] %v216, 128
    %869 = vxpose.xlu0.b32.cont [2/16] 0.0, 128
    %870 = vxpose.xlu0.b32.cont [3/16] 0.0, 128
    %871 = vxpose.xlu0.b32.cont [4/16] 0.0, 128
    %872 = vxpose.xlu0.b32.cont [5/16] 0.0, 128
    %873 = vxpose.xlu0.b32.cont [6/16] 0.0, 128
    %874 = vxpose.xlu0.b32.cont [7/16] 0.0, 128
    %875 = vxpose.xlu0.b32.cont [8/16] 0.0, 128
    %876 = vxpose.xlu0.b32.cont [9/16] 0.0, 128
    %877 = vxpose.xlu0.b32.cont [10/16] 0.0, 128
    %878 = vxpose.xlu0.b32.cont [11/16] 0.0, 128
    %879 = vxpose.xlu0.b32.cont [12/16] 0.0, 128
    %880 = vxpose.xlu0.b32.cont [13/16] 0.0, 128
    %881 = vxpose.xlu0.b32.cont [14/16] 0.0, 128
    %882 = vxpose.xlu0.b32.cont [15/16] 0.0, 128
    %883 = vxpose.xlu0.b32.end [16/16] 0.0, 128
    %v884 = vpop.trf.xlu0
    %v885 = vpop.trf.xlu0
    %v886 = vpop.trf.xlu0
    %v887 = vpop.trf.xlu0
    %v888 = vpop.trf.xlu0
    %v889 = vpop.trf.xlu0
    %v890 = vpop.trf.xlu0
    %v891 = vpop.trf.xlu0
    %v892 = vpop.trf.xlu0
    %v893 = vpop.trf.xlu0
    %v894 = vpop.trf.xlu0
    %v895 = vpop.trf.xlu0
    %v896 = vpop.trf.xlu0
    %v897 = vpop.trf.xlu0
    %v898 = vpop.trf.xlu0
    %v899 = vpop.trf.xlu0
    %v901 = vsel %vm296, %v884, 0
    %v904 = vsel %vm296, %v885, 0
    %906 = vmatprep.subr.mxu0 0.0
    %907 = vmatpush1.msra.mxu0 %v236
    %908 = vmatprep.subr.mxu0 0.0
    %909 = vmatpush1.msra.mxu0 0.0
    %910 = vmatprep.subr.mxu0 0.0
    %911 = vmatpush1.msra.mxu0 0.0
    %912 = vmatprep.subr.mxu0 0.0
    %913 = vmatpush1.msra.mxu0 0.0
    %914 = vmatprep.subr.mxu0 0.0
    %915 = vmatpush1.msra.mxu0 0.0
    %916 = vmatprep.subr.mxu0 0.0
    %917 = vmatpush1.msra.mxu0 0.0
    %918 = vmatprep.subr.mxu0 0.0
    %919 = vmatpush1.msra.mxu0 0.0
    %920 = vmatprep.subr.mxu0 0.0
    %921 = vmatpush1.msra.mxu0 0.0
    %922 = vmatprep.subr.mxu0 0.0
    %923 = vmatpush1.msra.mxu0 0.0
    %924 = vmatprep.subr.mxu0 0.0
    %925 = vmatpush1.msra.mxu0 0.0
    %926 = vmatprep.subr.mxu0 0.0
    %927 = vmatpush1.msra.mxu0 0.0
    %928 = vmatprep.subr.mxu0 0.0
    %929 = vmatpush1.msra.mxu0 0.0
    %930 = vmatprep.subr.mxu0 0.0
    %931 = vmatpush1.msra.mxu0 0.0
    %932 = vmatprep.subr.mxu0 0.0
    %933 = vmatpush1.msra.mxu0 0.0
    %934 = vmatprep.subr.mxu0 0.0
    %935 = vmatpush1.msra.mxu0 0.0
    %936 = vmatprep.subr.mxu0 0.0
    %937 = vmatpush1.msra.mxu0 0.0
    %938 = vmatprep.subr.mxu0 0.0
    %939 = vmatpush1.msra.mxu0 0.0
    %940 = vmatprep.subr.mxu0 0.0
    %941 = vmatpush1.msra.mxu0 0.0
    %942 = vmatprep.subr.mxu0 0.0
    %943 = vmatpush1.msra.mxu0 0.0
    %944 = vmatprep.subr.mxu0 0.0
    %945 = vmatpush1.msra.mxu0 0.0
    %946 = vmatprep.subr.mxu0 0.0
    %947 = vmatpush1.msra.mxu0 0.0
    %948 = vmatprep.subr.mxu0 0.0
    %949 = vmatpush1.msra.mxu0 0.0
    %950 = vmatprep.subr.mxu0 0.0
    %951 = vmatpush1.msra.mxu0 0.0
    %952 = vmatprep.subr.mxu0 0.0
    %953 = vmatpush1.msra.mxu0 0.0
    %954 = vmatprep.subr.mxu0 0.0
    %955 = vmatpush1.msra.mxu0 0.0
    %956 = vmatprep.subr.mxu0 0.0
    %957 = vmatpush1.msra.mxu0 0.0
    %958 = vmatprep.subr.mxu0 0.0
    %959 = vmatpush1.msra.mxu0 0.0
    %960 = vmatprep.subr.mxu0 0.0
    %961 = vmatpush1.msra.mxu0 0.0
    %962 = vmatprep.subr.mxu0 0.0
    %963 = vmatpush1.msra.mxu0 0.0
    %964 = vmatprep.subr.mxu0 0.0
    %965 = vmatpush1.msra.mxu0 0.0
    %966 = vmatprep.subr.mxu0 0.0
    %967 = vmatpush1.msra.mxu0 0.0
    %968 = vmatprep.subr.mxu0 0.0
    %969 = vmatpush1.msra.mxu0 0.0
    %970 = vmatprep.mubr.f32.mxu0 0.0
    %971 = vmatmul.mubr.f32.gmra.mrb[0].mxu0 %v901
    %v972 = vpop.f32.mrb[0].mxu0
    %v973 = vadd.f32 %v43, %v972
    %v974 = vpop.f32.mrb[0].mxu0
    %975 = vmatprep.mubr.f32.mxu0 0.0
    %976 = vmatmul.mubr.f32.gmra.mrb[0].mxu0 %v904
    %v977 = vpop.f32.mrb[0].mxu0
    %v978 = vadd.f32 %v44, %v977
    %v979 = vpop.f32.mrb[0].mxu0
    %980 = vdwg.mxu0
    %v981 = vsel %vm378, %v973, -inf
    %982 = vmax.xlane.f32.xlu0 %v981
    %v983 = vpop.xlane.xlu0 %982
    %v984 = vsel %vm378, %v978, -inf
    %985 = vmax.xlane.f32.xlu0 %v984
    %v986 = vpop.xlane.xlu0 %985
    %v987 = vsub.f32 %v973, %v983
    %v988 = vsub.f32 %v978, %v986
    %v989 = vmul.f32 %v987, 1.442695
    %v990 = vpow.pop %v989
    %v991 = vmul.f32 %v988, 1.442695
    %v992 = vpow.pop %v991
    %v993 = vsel %vm378, %v990, 0.0
    %994 = vadd.xlane.f32.xlu0 %v993
    %v995 = vpop.xlane.xlu0 %994
    %v996 = vsel %vm378, %v992, 0.0
    %997 = vadd.xlane.f32.xlu0 %v996
    %v998 = vpop.xlane.xlu0 %997
    %v999 = vrcp.pop %v995
    %v1000 = vrcp.pop %v998
    %v1001 = vmul.f32 %v990, %v999
    %v1002 = vmul.f32 %v992, %v1000
    %v1004 = vsel %vm378, %v1001, 0
    %v1007 = vsel %vm378, %v1002, 0
    %v1010 = vsel %vm378, %v256, 0
    %1012 = vmatprep.subr.mxu0 0.0
    %1013 = vmatpush1.xpose.msra.mxu0 %v1010
    %1014 = vmatprep.subr.mxu0 0.0
    %1015 = vmatpush1.xpose.msra.mxu0 0.0
    %1016 = vmatprep.subr.mxu0 0.0
    %1017 = vmatpush1.xpose.msra.mxu0 0.0
    %1018 = vmatprep.subr.mxu0 0.0
    %1019 = vmatpush1.xpose.msra.mxu0 0.0
    %1020 = vmatprep.subr.mxu0 0.0
    %1021 = vmatpush1.xpose.msra.mxu0 0.0
    %1022 = vmatprep.subr.mxu0 0.0
    %1023 = vmatpush1.xpose.msra.mxu0 0.0
    %1024 = vmatprep.subr.mxu0 0.0
    %1025 = vmatpush1.xpose.msra.mxu0 0.0
    %1026 = vmatprep.subr.mxu0 0.0
    %1027 = vmatpush1.xpose.msra.mxu0 0.0
    %1028 = vmatprep.subr.mxu0 0.0
    %1029 = vmatpush1.xpose.msra.mxu0 0.0
    %1030 = vmatprep.subr.mxu0 0.0
    %1031 = vmatpush1.xpose.msra.mxu0 0.0
    %1032 = vmatprep.subr.mxu0 0.0
    %1033 = vmatpush1.xpose.msra.mxu0 0.0
    %1034 = vmatprep.subr.mxu0 0.0
    %1035 = vmatpush1.xpose.msra.mxu0 0.0
    %1036 = vmatprep.subr.mxu0 0.0
    %1037 = vmatpush1.xpose.msra.mxu0 0.0
    %1038 = vmatprep.subr.mxu0 0.0
    %1039 = vmatpush1.xpose.msra.mxu0 0.0
    %1040 = vmatprep.subr.mxu0 0.0
    %1041 = vmatpush1.xpose.msra.mxu0 0.0
    %1042 = vmatprep.subr.mxu0 0.0
    %1043 = vmatpush1.xpose.msra.mxu0 0.0
    %1044 = vmatprep.subr.mxu0 0.0
    %1045 = vmatpush1.xpose.msra.mxu0 0.0
    %1046 = vmatprep.subr.mxu0 0.0
    %1047 = vmatpush1.xpose.msra.mxu0 0.0
    %1048 = vmatprep.subr.mxu0 0.0
    %1049 = vmatpush1.xpose.msra.mxu0 0.0
    %1050 = vmatprep.subr.mxu0 0.0
    %1051 = vmatpush1.xpose.msra.mxu0 0.0
    %1052 = vmatprep.subr.mxu0 0.0
    %1053 = vmatpush1.xpose.msra.mxu0 0.0
    %1054 = vmatprep.subr.mxu0 0.0
    %1055 = vmatpush1.xpose.msra.mxu0 0.0
    %1056 = vmatprep.subr.mxu0 0.0
    %1057 = vmatpush1.xpose.msra.mxu0 0.0
    %1058 = vmatprep.subr.mxu0 0.0
    %1059 = vmatpush1.xpose.msra.mxu0 0.0
    %1060 = vmatprep.subr.mxu0 0.0
    %1061 = vmatpush1.xpose.msra.mxu0 0.0
    %1062 = vmatprep.subr.mxu0 0.0
    %1063 = vmatpush1.xpose.msra.mxu0 0.0
    %1064 = vmatprep.subr.mxu0 0.0
    %1065 = vmatpush1.xpose.msra.mxu0 0.0
    %1066 = vmatprep.subr.mxu0 0.0
    %1067 = vmatpush1.xpose.msra.mxu0 0.0
    %1068 = vmatprep.subr.mxu0 0.0
    %1069 = vmatpush1.xpose.msra.mxu0 0.0
    %1070 = vmatprep.subr.mxu0 0.0
    %1071 = vmatpush1.xpose.msra.mxu0 0.0
    %1072 = vmatprep.subr.mxu0 0.0
    %1073 = vmatpush1.xpose.msra.mxu0 0.0
    %1074 = vmatprep.subr.mxu0 0.0
    %1075 = vmatpush1.xpose.msra.mxu0 0.0
    %1076 = vmatprep.mubr.f32.mxu0 0.0
    %1077 = vmatmul.mubr.f32.gmra.mrb[0].mxu0 %v1004
    %v1078 = vpop.f32.mrb[0].mxu0
    %v1079 = vadd.f32 0.0, %v1078
    %v1080 = vpop.f32.mrb[0].mxu0
    %1081 = vmatprep.mubr.f32.mxu0 0.0
    %1082 = vmatmul.mubr.f32.gmra.mrb[0].mxu0 %v1007
    %v1083 = vpop.f32.mrb[0].mxu0
    %v1084 = vadd.f32 0.0, %v1083
    %v1085 = vpop.f32.mrb[0].mxu0
    %1086 = vdwg.mxu0
    %v1087 = vld [vmem:[#allocation5 + $0x38] sm:$0xff]
    %v1089 = vsel %vm296, %v1079, 0
    %v1092 = vsel %vm296, %v1084, 0
    %1094 = vmatprep.subr.mxu0 0.0
    %1095 = vmatpush1.msra.mxu0 %v1087
    %1096 = vmatprep.subr.mxu0 0.0
    %1097 = vmatpush1.msra.mxu0 0.0
    %1098 = vmatprep.subr.mxu0 0.0
    %1099 = vmatpush1.msra.mxu0 0.0
    %1100 = vmatprep.subr.mxu0 0.0
    %1101 = vmatpush1.msra.mxu0 0.0
    %1102 = vmatprep.subr.mxu0 0.0
    %1103 = vmatpush1.msra.mxu0 0.0
    %1104 = vmatprep.subr.mxu0 0.0
    %1105 = vmatpush1.msra.mxu0 0.0
    %1106 = vmatprep.subr.mxu0 0.0
    %1107 = vmatpush1.msra.mxu0 0.0
    %1108 = vmatprep.subr.mxu0 0.0
    %1109 = vmatpush1.msra.mxu0 0.0
    %1110 = vmatprep.subr.mxu0 0.0
    %1111 = vmatpush1.msra.mxu0 0.0
    %1112 = vmatprep.subr.mxu0 0.0
    %1113 = vmatpush1.msra.mxu0 0.0
    %1114 = vmatprep.subr.mxu0 0.0
    %1115 = vmatpush1.msra.mxu0 0.0
    %1116 = vmatprep.subr.mxu0 0.0
    %1117 = vmatpush1.msra.mxu0 0.0
    %1118 = vmatprep.subr.mxu0 0.0
    %1119 = vmatpush1.msra.mxu0 0.0
    %1120 = vmatprep.subr.mxu0 0.0
    %1121 = vmatpush1.msra.mxu0 0.0
    %1122 = vmatprep.subr.mxu0 0.0
    %1123 = vmatpush1.msra.mxu0 0.0
    %1124 = vmatprep.subr.mxu0 0.0
    %1125 = vmatpush1.msra.mxu0 0.0
    %1126 = vmatprep.subr.mxu0 0.0
    %1127 = vmatpush1.msra.mxu0 0.0
    %1128 = vmatprep.subr.mxu0 0.0
    %1129 = vmatpush1.msra.mxu0 0.0
    %1130 = vmatprep.subr.mxu0 0.0
    %1131 = vmatpush1.msra.mxu0 0.0
    %1132 = vmatprep.subr.mxu0 0.0
    %1133 = vmatpush1.msra.mxu0 0.0
    %1134 = vmatprep.subr.mxu0 0.0
    %1135 = vmatpush1.msra.mxu0 0.0
    %1136 = vmatprep.subr.mxu0 0.0
    %1137 = vmatpush1.msra.mxu0 0.0
    %1138 = vmatprep.subr.mxu0 0.0
    %1139 = vmatpush1.msra.mxu0 0.0
    %1140 = vmatprep.subr.mxu0 0.0
    %1141 = vmatpush1.msra.mxu0 0.0
    %1142 = vmatprep.subr.mxu0 0.0
    %1143 = vmatpush1.msra.mxu0 0.0
    %1144 = vmatprep.subr.mxu0 0.0
    %1145 = vmatpush1.msra.mxu0 0.0
    %1146 = vmatprep.subr.mxu0 0.0
    %1147 = vmatpush1.msra.mxu0 0.0
    %1148 = vmatprep.subr.mxu0 0.0
    %1149 = vmatpush1.msra.mxu0 0.0
    %1150 = vmatprep.subr.mxu0 0.0
    %1151 = vmatpush1.msra.mxu0 0.0
    %1152 = vmatprep.subr.mxu0 0.0
    %1153 = vmatpush1.msra.mxu0 0.0
    %1154 = vmatprep.subr.mxu0 0.0
    %1155 = vmatpush1.msra.mxu0 0.0
    %1156 = vmatprep.subr.mxu0 0.0
    %1157 = vmatpush1.msra.mxu0 0.0
    %1158 = vmatprep.mubr.f32.mxu0 0.0
    %1159 = vmatmul.mubr.f32.gmra.mrb[0].mxu0 %v1089
    %v1160 = vpop.f32.mrb[0].mxu0
    %v1161 = vadd.f32 0.0, %v1160
    %v1162 = vpop.f32.mrb[0].mxu0
    %1163 = vmatprep.mubr.f32.mxu0 0.0
    %1164 = vmatmul.mubr.f32.gmra.mrb[0].mxu0 %v1092
    %v1165 = vpop.f32.mrb[0].mxu0
    %v1166 = vadd.f32 0.0, %v1165
    %v1167 = vpop.f32.mrb[0].mxu0
    %1168 = vdwg.mxu0
    %v1169 = vadd.f32 %v860, %v1161
    %v1170 = vadd.f32 %v865, %v1166
    %1171 = vxpose.xlu0.b32.start [1/16] %v221, 128
    %1172 = vxpose.xlu0.b32.cont [2/16] 0.0, 128
    %1173 = vxpose.xlu0.b32.cont [3/16] 0.0, 128
    %1174 = vxpose.xlu0.b32.cont [4/16] 0.0, 128
    %1175 = vxpose.xlu0.b32.cont [5/16] 0.0, 128
    %1176 = vxpose.xlu0.b32.cont [6/16] 0.0, 128
    %1177 = vxpose.xlu0.b32.cont [7/16] 0.0, 128
    %1178 = vxpose.xlu0.b32.cont [8/16] 0.0, 128
    %1179 = vxpose.xlu0.b32.cont [9/16] 0.0, 128
    %1180 = vxpose.xlu0.b32.cont [10/16] 0.0, 128
    %1181 = vxpose.xlu0.b32.cont [11/16] 0.0, 128
    %1182 = vxpose.xlu0.b32.cont [12/16] 0.0, 128
    %1183 = vxpose.xlu0.b32.cont [13/16] 0.0, 128
    %1184 = vxpose.xlu0.b32.cont [14/16] 0.0, 128
    %1185 = vxpose.xlu0.b32.cont [15/16] 0.0, 128
    %1186 = vxpose.xlu0.b32.end [16/16] 0.0, 128
    %v1187 = vpop.trf.xlu0
    %v1188 = vpop.trf.xlu0
    %v1189 = vpop.trf.xlu0
    %v1190 = vpop.trf.xlu0
    %v1191 = vpop.trf.xlu0
    %v1192 = vpop.trf.xlu0
    %v1193 = vpop.trf.xlu0
    %v1194 = vpop.trf.xlu0
    %v1195 = vpop.trf.xlu0
    %v1196 = vpop.trf.xlu0
    %v1197 = vpop.trf.xlu0
    %v1198 = vpop.trf.xlu0
    %v1199 = vpop.trf.xlu0
    %v1200 = vpop.trf.xlu0
    %v1201 = vpop.trf.xlu0
    %v1202 = vpop.trf.xlu0
    %v1204 = vsel %vm296, %v1187, 0
    %v1207 = vsel %vm296, %v1188, 0
    %1209 = vmatprep.subr.mxu0 0.0
    %1210 = vmatpush1.msra.mxu0 %v241
    %1211 = vmatprep.subr.mxu0 0.0
    %1212 = vmatpush1.msra.mxu0 0.0
    %1213 = vmatprep.subr.mxu0 0.0
    %1214 = vmatpush1.msra.mxu0 0.0
    %1215 = vmatprep.subr.mxu0 0.0
    %1216 = vmatpush1.msra.mxu0 0.0
    %1217 = vmatprep.subr.mxu0 0.0
    %1218 = vmatpush1.msra.mxu0 0.0
    %1219 = vmatprep.subr.mxu0 0.0
    %1220 = vmatpush1.msra.mxu0 0.0
    %1221 = vmatprep.subr.mxu0 0.0
    %1222 = vmatpush1.msra.mxu0 0.0
    %1223 = vmatprep.subr.mxu0 0.0
    %1224 = vmatpush1.msra.mxu0 0.0
    %1225 = vmatprep.subr.mxu0 0.0
    %1226 = vmatpush1.msra.mxu0 0.0
    %1227 = vmatprep.subr.mxu0 0.0
    %1228 = vmatpush1.msra.mxu0 0.0
    %1229 = vmatprep.subr.mxu0 0.0
    %1230 = vmatpush1.msra.mxu0 0.0
    %1231 = vmatprep.subr.mxu0 0.0
    %1232 = vmatpush1.msra.mxu0 0.0
    %1233 = vmatprep.subr.mxu0 0.0
    %1234 = vmatpush1.msra.mxu0 0.0
    %1235 = vmatprep.subr.mxu0 0.0
    %1236 = vmatpush1.msra.mxu0 0.0
    %1237 = vmatprep.subr.mxu0 0.0
    %1238 = vmatpush1.msra.mxu0 0.0
    %1239 = vmatprep.subr.mxu0 0.0
    %1240 = vmatpush1.msra.mxu0 0.0
    %1241 = vmatprep.subr.mxu0 0.0
    %1242 = vmatpush1.msra.mxu0 0.0
    %1243 = vmatprep.subr.mxu0 0.0
    %1244 = vmatpush1.msra.mxu0 0.0
    %1245 = vmatprep.subr.mxu0 0.0
    %1246 = vmatpush1.msra.mxu0 0.0
    %1247 = vmatprep.subr.mxu0 0.0
    %1248 = vmatpush1.msra.mxu0 0.0
    %1249 = vmatprep.subr.mxu0 0.0
    %1250 = vmatpush1.msra.mxu0 0.0
    %1251 = vmatprep.subr.mxu0 0.0
    %1252 = vmatpush1.msra.mxu0 0.0
    %1253 = vmatprep.subr.mxu0 0.0
    %1254 = vmatpush1.msra.mxu0 0.0
    %1255 = vmatprep.subr.mxu0 0.0
    %1256 = vmatpush1.msra.mxu0 0.0
    %1257 = vmatprep.subr.mxu0 0.0
    %1258 = vmatpush1.msra.mxu0 0.0
    %1259 = vmatprep.subr.mxu0 0.0
    %1260 = vmatpush1.msra.mxu0 0.0
    %1261 = vmatprep.subr.mxu0 0.0
    %1262 = vmatpush1.msra.mxu0 0.0
    %1263 = vmatprep.subr.mxu0 0.0
    %1264 = vmatpush1.msra.mxu0 0.0
    %1265 = vmatprep.subr.mxu0 0.0
    %1266 = vmatpush1.msra.mxu0 0.0
    %1267 = vmatprep.subr.mxu0 0.0
    %1268 = vmatpush1.msra.mxu0 0.0
    %1269 = vmatprep.subr.mxu0 0.0
    %1270 = vmatpush1.msra.mxu0 0.0
    %1271 = vmatprep.subr.mxu0 0.0
    %1272 = vmatpush1.msra.mxu0 0.0
    %1273 = vmatprep.mubr.f32.mxu0 0.0
    %1274 = vmatmul.mubr.f32.gmra.mrb[0].mxu0 %v1204
    %v1275 = vpop.f32.mrb[0].mxu0
    %v1276 = vadd.f32 %v43, %v1275
    %v1277 = vpop.f32.mrb[0].mxu0
    %1278 = vmatprep.mubr.f32.mxu0 0.0
    %1279 = vmatmul.mubr.f32.gmra.mrb[0].mxu0 %v1207
    %v1280 = vpop.f32.mrb[0].mxu0
    %v1281 = vadd.f32 %v44, %v1280
    %v1282 = vpop.f32.mrb[0].mxu0
    %1283 = vdwg.mxu0
    %v1284 = vsel %vm378, %v1276, -inf
    %1285 = vmax.xlane.f32.xlu0 %v1284
    %v1286 = vpop.xlane.xlu0 %1285
    %v1287 = vsel %vm378, %v1281, -inf
    %1288 = vmax.xlane.f32.xlu0 %v1287
    %v1289 = vpop.xlane.xlu0 %1288
    %v1290 = vsub.f32 %v1276, %v1286
    %v1291 = vsub.f32 %v1281, %v1289
    %v1292 = vmul.f32 %v1290, 1.442695
    %v1293 = vpow.pop %v1292
    %v1294 = vmul.f32 %v1291, 1.442695
    %v1295 = vpow.pop %v1294
    %v1296 = vsel %vm378, %v1293, 0.0
    %1297 = vadd.xlane.f32.xlu0 %v1296
    %v1298 = vpop.xlane.xlu0 %1297
    %v1299 = vsel %vm378, %v1295, 0.0
    %1300 = vadd.xlane.f32.xlu0 %v1299
    %v1301 = vpop.xlane.xlu0 %1300
    %v1302 = vrcp.pop %v1298
    %v1303 = vrcp.pop %v1301
    %v1304 = vmul.f32 %v1293, %v1302
    %v1305 = vmul.f32 %v1295, %v1303
    %v1307 = vsel %vm378, %v1304, 0
    %v1310 = vsel %vm378, %v1305, 0
    %v1313 = vsel %vm378, %v261, 0
    %1315 = vmatprep.subr.mxu0 0.0
    %1316 = vmatpush1.xpose.msra.mxu0 %v1313
    %1317 = vmatprep.subr.mxu0 0.0
    %1318 = vmatpush1.xpose.msra.mxu0 0.0
    %1319 = vmatprep.subr.mxu0 0.0
    %1320 = vmatpush1.xpose.msra.mxu0 0.0
    %1321 = vmatprep.subr.mxu0 0.0
    %1322 = vmatpush1.xpose.msra.mxu0 0.0
    %1323 = vmatprep.subr.mxu0 0.0
    %1324 = vmatpush1.xpose.msra.mxu0 0.0
    %1325 = vmatprep.subr.mxu0 0.0
    %1326 = vmatpush1.xpose.msra.mxu0 0.0
    %1327 = vmatprep.subr.mxu0 0.0
    %1328 = vmatpush1.xpose.msra.mxu0 0.0
    %1329 = vmatprep.subr.mxu0 0.0
    %1330 = vmatpush1.xpose.msra.mxu0 0.0
    %1331 = vmatprep.subr.mxu0 0.0
    %1332 = vmatpush1.xpose.msra.mxu0 0.0
    %1333 = vmatprep.subr.mxu0 0.0
    %1334 = vmatpush1.xpose.msra.mxu0 0.0
    %1335 = vmatprep.subr.mxu0 0.0
    %1336 = vmatpush1.xpose.msra.mxu0 0.0
    %1337 = vmatprep.subr.mxu0 0.0
    %1338 = vmatpush1.xpose.msra.mxu0 0.0
    %1339 = vmatprep.subr.mxu0 0.0
    %1340 = vmatpush1.xpose.msra.mxu0 0.0
    %1341 = vmatprep.subr.mxu0 0.0
    %1342 = vmatpush1.xpose.msra.mxu0 0.0
    %1343 = vmatprep.subr.mxu0 0.0
    %1344 = vmatpush1.xpose.msra.mxu0 0.0
    %1345 = vmatprep.subr.mxu0 0.0
    %1346 = vmatpush1.xpose.msra.mxu0 0.0
    %1347 = vmatprep.subr.mxu0 0.0
    %1348 = vmatpush1.xpose.msra.mxu0 0.0
    %1349 = vmatprep.subr.mxu0 0.0
    %1350 = vmatpush1.xpose.msra.mxu0 0.0
    %1351 = vmatprep.subr.mxu0 0.0
    %1352 = vmatpush1.xpose.msra.mxu0 0.0
    %1353 = vmatprep.subr.mxu0 0.0
    %1354 = vmatpush1.xpose.msra.mxu0 0.0
    %1355 = vmatprep.subr.mxu0 0.0
    %1356 = vmatpush1.xpose.msra.mxu0 0.0
    %1357 = vmatprep.subr.mxu0 0.0
    %1358 = vmatpush1.xpose.msra.mxu0 0.0
    %1359 = vmatprep.subr.mxu0 0.0
    %1360 = vmatpush1.xpose.msra.mxu0 0.0
    %1361 = vmatprep.subr.mxu0 0.0
    %1362 = vmatpush1.xpose.msra.mxu0 0.0
    %1363 = vmatprep.subr.mxu0 0.0
    %1364 = vmatpush1.xpose.msra.mxu0 0.0
    %1365 = vmatprep.subr.mxu0 0.0
    %1366 = vmatpush1.xpose.msra.mxu0 0.0
    %1367 = vmatprep.subr.mxu0 0.0
    %1368 = vmatpush1.xpose.msra.mxu0 0.0
    %1369 = vmatprep.subr.mxu0 0.0
    %1370 = vmatpush1.xpose.msra.mxu0 0.0
    %1371 = vmatprep.subr.mxu0 0.0
    %1372 = vmatpush1.xpose.msra.mxu0 0.0
    %1373 = vmatprep.subr.mxu0 0.0
    %1374 = vmatpush1.xpose.msra.mxu0 0.0
    %1375 = vmatprep.subr.mxu0 0.0
    %1376 = vmatpush1.xpose.msra.mxu0 0.0
    %1377 = vmatprep.subr.mxu0 0.0
    %1378 = vmatpush1.xpose.msra.mxu0 0.0
    %1379 = vmatprep.mubr.f32.mxu0 0.0
    %1380 = vmatmul.mubr.f32.gmra.mrb[0].mxu0 %v1307
    %v1381 = vpop.f32.mrb[0].mxu0
    %v1382 = vadd.f32 0.0, %v1381
    %v1383 = vpop.f32.mrb[0].mxu0
    %1384 = vmatprep.mubr.f32.mxu0 0.0
    %1385 = vmatmul.mubr.f32.gmra.mrb[0].mxu0 %v1310
    %v1386 = vpop.f32.mrb[0].mxu0
    %v1387 = vadd.f32 0.0, %v1386
    %v1388 = vpop.f32.mrb[0].mxu0
    %1389 = vdwg.mxu0
    %v1390 = vld [vmem:[#allocation5 + $0x50] sm:$0xff]
    %v1392 = vsel %vm296, %v1382, 0
    %v1395 = vsel %vm296, %v1387, 0
    %1397 = vmatprep.subr.mxu0 0.0
    %1398 = vmatpush1.msra.mxu0 %v1390
    %1399 = vmatprep.subr.mxu0 0.0
    %1400 = vmatpush1.msra.mxu0 0.0
    %1401 = vmatprep.subr.mxu0 0.0
    %1402 = vmatpush1.msra.mxu0 0.0
    %1403 = vmatprep.subr.mxu0 0.0
    %1404 = vmatpush1.msra.mxu0 0.0
    %1405 = vmatprep.subr.mxu0 0.0
    %1406 = vmatpush1.msra.mxu0 0.0
    %1407 = vmatprep.subr.mxu0 0.0
    %1408 = vmatpush1.msra.mxu0 0.0
    %1409 = vmatprep.subr.mxu0 0.0
    %1410 = vmatpush1.msra.mxu0 0.0
    %1411 = vmatprep.subr.mxu0 0.0
    %1412 = vmatpush1.msra.mxu0 0.0
    %1413 = vmatprep.subr.mxu0 0.0
    %1414 = vmatpush1.msra.mxu0 0.0
    %1415 = vmatprep.subr.mxu0 0.0
    %1416 = vmatpush1.msra.mxu0 0.0
    %1417 = vmatprep.subr.mxu0 0.0
    %1418 = vmatpush1.msra.mxu0 0.0
    %1419 = vmatprep.subr.mxu0 0.0
    %1420 = vmatpush1.msra.mxu0 0.0
    %1421 = vmatprep.subr.mxu0 0.0
    %1422 = vmatpush1.msra.mxu0 0.0
    %1423 = vmatprep.subr.mxu0 0.0
    %1424 = vmatpush1.msra.mxu0 0.0
    %1425 = vmatprep.subr.mxu0 0.0
    %1426 = vmatpush1.msra.mxu0 0.0
    %1427 = vmatprep.subr.mxu0 0.0
    %1428 = vmatpush1.msra.mxu0 0.0
    %1429 = vmatprep.subr.mxu0 0.0
    %1430 = vmatpush1.msra.mxu0 0.0
    %1431 = vmatprep.subr.mxu0 0.0
    %1432 = vmatpush1.msra.mxu0 0.0
    %1433 = vmatprep.subr.mxu0 0.0
    %1434 = vmatpush1.msra.mxu0 0.0
    %1435 = vmatprep.subr.mxu0 0.0
    %1436 = vmatpush1.msra.mxu0 0.0
    %1437 = vmatprep.subr.mxu0 0.0
    %1438 = vmatpush1.msra.mxu0 0.0
    %1439 = vmatprep.subr.mxu0 0.0
    %1440 = vmatpush1.msra.mxu0 0.0
    %1441 = vmatprep.subr.mxu0 0.0
    %1442 = vmatpush1.msra.mxu0 0.0
    %1443 = vmatprep.subr.mxu0 0.0
    %1444 = vmatpush1.msra.mxu0 0.0
    %1445 = vmatprep.subr.mxu0 0.0
    %1446 = vmatpush1.msra.mxu0 0.0
    %1447 = vmatprep.subr.mxu0 0.0
    %1448 = vmatpush1.msra.mxu0 0.0
    %1449 = vmatprep.subr.mxu0 0.0
    %1450 = vmatpush1.msra.mxu0 0.0
    %1451 = vmatprep.subr.mxu0 0.0
    %1452 = vmatpush1.msra.mxu0 0.0
    %1453 = vmatprep.subr.mxu0 0.0
    %1454 = vmatpush1.msra.mxu0 0.0
    %1455 = vmatprep.subr.mxu0 0.0
    %1456 = vmatpush1.msra.mxu0 0.0
    %1457 = vmatprep.subr.mxu0 0.0
    %1458 = vmatpush1.msra.mxu0 0.0
    %1459 = vmatprep.subr.mxu0 0.0
    %1460 = vmatpush1.msra.mxu0 0.0
    %1461 = vmatprep.mubr.f32.mxu0 0.0
    %1462 = vmatmul.mubr.f32.gmra.mrb[0].mxu0 %v1392
    %v1463 = vpop.f32.mrb[0].mxu0
    %v1464 = vadd.f32 0.0, %v1463
    %v1465 = vpop.f32.mrb[0].mxu0
    %1466 = vmatprep.mubr.f32.mxu0 0.0
    %1467 = vmatmul.mubr.f32.gmra.mrb[0].mxu0 %v1395
    %v1468 = vpop.f32.mrb[0].mxu0
    %v1469 = vadd.f32 0.0, %v1468
    %v1470 = vpop.f32.mrb[0].mxu0
    %1471 = vdwg.mxu0
    %v1472 = vadd.f32 %v1169, %v1464
    %v1473 = vadd.f32 %v1170, %v1469
    %v1474 = vadd.f32 %v40, %v1472
    %v1475 = vadd.f32 %v41, %v1473
    %v1476 = vlaneseq
    %v1477 = vshrl.u32 %v1476, 7
    %v1478 = vsub.s32 4, %v1477
    %v1479 = vrot.slane %v42, %v1478
    %v1480 = vadd.f32 %v1474, %v1479
    %v1481 = vadd.f32 %v1475, %v1479
    %v1482 = vsel %vm45, %v1480, 0.0
    %1483 = vadd.xlane.f32.xlu0 %v1482
    %v1484 = vpop.xlane.xlu0 %1483
    %v1485 = vsel %vm45, %v1481, 0.0
    %1486 = vadd.xlane.f32.xlu0 %v1485
    %v1487 = vpop.xlane.xlu0 %1486
    %v1488 = vmul.f32 %v1484, %v52
    %v1489 = vmul.f32 %v1487, %v52
    %v1490 = vsub.f32 %v1480, %v1488
    %v1491 = vsub.f32 %v1481, %v1489
    %v1492 = vmul.f32 %v1490, %v1490
    %v1493 = vmul.f32 %v1491, %v1491
    %v1494 = vsel %vm45, %v1492, 0.0
    %1495 = vadd.xlane.f32.xlu0 %v1494
    %v1496 = vpop.xlane.xlu0 %1495
    %v1497 = vsel %vm45, %v1493, 0.0
    %1498 = vadd.xlane.f32.xlu0 %v1497
    %v1499 = vpop.xlane.xlu0 %1498
    %v1500 = vmul.f32 %v1496, %v52
    %v1501 = vmul.f32 %v1499, %v52
    %v1502 = vadd.f32 %v1500, 1e-05
    %v1503 = vadd.f32 %v1501, 1e-05
    %v1504 = vrsqrt.pop %v1502
    %v1505 = vrsqrt.pop %v1503
    %v1506 = vmul.f32 %v1490, %v1504
    %v1507 = vmul.f32 %v1491, %v1505
    %v1508 = vlaneseq
    %v1509 = vshrl.u32 %v1508, 7
    %v1510 = vsub.s32 2, %v1509
    %v1511 = vrot.slane %v42, %v1510
    %v1512 = vmul.f32 %v1506, %v1511
    %v1513 = vmul.f32 %v1507, %v1511
    %v1514 = vlaneseq
    %v1515 = vshrl.u32 %v1514, 7
    %v1516 = vsub.s32 3, %v1515
    %v1517 = vrot.slane %v42, %v1516
    %v1518 = vadd.f32 %v1512, %v1517
    %v1519 = vadd.f32 %v1513, %v1517
    %v1520 = vld [vmem:[#allocation5 + $0x10] sm:$0xff]
    %v1521 = vld [vmem:[#allocation5 + $0x28] sm:$0xff]
    %v1522 = vld [vmem:[#allocation5 + $0x40] sm:$0xff]
    %v1523 = vld [vmem:[#allocation5 + $0x58] sm:$0xff]
    %v1524 = vld [vmem:[#allocation5 + $0x68] sm:$0xff]
    %v1525 = vld [vmem:[#allocation5 + $0x80] sm:$0xff]
    %v1526 = vld [vmem:[#allocation5 + $0x98] sm:$0xff]
    %v1527 = vld [vmem:[#allocation5 + $0xb0] sm:$0xff]
    %v1528 = vld [vmem:[#allocation5 + $0xc8] sm:$0xff]
    %v1529 = vld [vmem:[#allocation5 + $0xe0] sm:$0xff]
    %v1530 = vld [vmem:[#allocation5 + $0xf8] sm:$0xff]
    %v1531 = vld [vmem:[#allocation5 + $0x110] sm:$0xff]
    %v1532 = vld [vmem:[#allocation5 + $0x128] sm:$0xff]
    %v1533 = vld [vmem:[#allocation5 + $0x140] sm:$0xff]
    %v1534 = vld [vmem:[#allocation5 + $0x158] sm:$0xff]
    %v1535 = vld [vmem:[#allocation5 + $0x170] sm:$0xff]
    %v1536 = vld [vmem:[#allocation5 + $0x188] sm:$0xff]
    %v1537 = vld [vmem:[#allocation5 + $0x1a0] sm:$0xff]
    %v1538 = vld [vmem:[#allocation5 + $0x1b8] sm:$0xff]
    %v1539 = vld [vmem:[#allocation5 + $0x1d0] sm:$0xff]
    %v1540 = vlaneseq
    %v1541 = vshrl.u32 %v1540, 7
    %v1542 = vsub.s32 6, %v1541
    %v1543 = vrot.slane %v42, %v1542
    %v1545 = vsel %vm45, %v1518, 0
    %v1548 = vsel %vm45, %v1519, 0
    %1550 = vmatprep.subr.mxu0 0.0
    %1551 = vmatpush1.msra.mxu0 %v1520
    %1552 = vmatprep.subr.mxu0 0.0
    %1553 = vmatpush1.msra.mxu0 %v1521
    %1554 = vmatprep.subr.mxu0 0.0
    %1555 = vmatpush1.msra.mxu0 %v1522
    %1556 = vmatprep.subr.mxu0 0.0
    %1557 = vmatpush1.msra.mxu0 %v1523
    %1558 = vmatprep.subr.mxu0 0.0
    %1559 = vmatpush1.msra.mxu0 0.0
    %1560 = vmatprep.subr.mxu0 0.0
    %1561 = vmatpush1.msra.mxu0 0.0
    %1562 = vmatprep.subr.mxu0 0.0
    %1563 = vmatpush1.msra.mxu0 0.0
    %1564 = vmatprep.subr.mxu0 0.0
    %1565 = vmatpush1.msra.mxu0 0.0
    %1566 = vmatprep.subr.mxu0 0.0
    %1567 = vmatpush1.msra.mxu0 0.0
    %1568 = vmatprep.subr.mxu0 0.0
    %1569 = vmatpush1.msra.mxu0 0.0
    %1570 = vmatprep.subr.mxu0 0.0
    %1571 = vmatpush1.msra.mxu0 0.0
    %1572 = vmatprep.subr.mxu0 0.0
    %1573 = vmatpush1.msra.mxu0 0.0
    %1574 = vmatprep.subr.mxu0 0.0
    %1575 = vmatpush1.msra.mxu0 0.0
    %1576 = vmatprep.subr.mxu0 0.0
    %1577 = vmatpush1.msra.mxu0 0.0
    %1578 = vmatprep.subr.mxu0 0.0
    %1579 = vmatpush1.msra.mxu0 0.0
    %1580 = vmatprep.subr.mxu0 0.0
    %1581 = vmatpush1.msra.mxu0 0.0
    %1582 = vmatprep.subr.mxu0 0.0
    %1583 = vmatpush1.msra.mxu0 0.0
    %1584 = vmatprep.subr.mxu0 0.0
    %1585 = vmatpush1.msra.mxu0 0.0
    %1586 = vmatprep.subr.mxu0 0.0
    %1587 = vmatpush1.msra.mxu0 0.0
    %1588 = vmatprep.subr.mxu0 0.0
    %1589 = vmatpush1.msra.mxu0 0.0
    %1590 = vmatprep.subr.mxu0 0.0
    %1591 = vmatpush1.msra.mxu0 0.0
    %1592 = vmatprep.subr.mxu0 0.0
    %1593 = vmatpush1.msra.mxu0 0.0
    %1594 = vmatprep.subr.mxu0 0.0
    %1595 = vmatpush1.msra.mxu0 0.0
    %1596 = vmatprep.subr.mxu0 0.0
    %1597 = vmatpush1.msra.mxu0 0.0
    %1598 = vmatprep.subr.mxu0 0.0
    %1599 = vmatpush1.msra.mxu0 0.0
    %1600 = vmatprep.subr.mxu0 0.0
    %1601 = vmatpush1.msra.mxu0 0.0
    %1602 = vmatprep.subr.mxu0 0.0
    %1603 = vmatpush1.msra.mxu0 0.0
    %1604 = vmatprep.subr.mxu0 0.0
    %1605 = vmatpush1.msra.mxu0 0.0
    %1606 = vmatprep.subr.mxu0 0.0
    %1607 = vmatpush1.msra.mxu0 0.0
    %1608 = vmatprep.subr.mxu0 0.0
    %1609 = vmatpush1.msra.mxu0 0.0
    %1610 = vmatprep.subr.mxu0 0.0
    %1611 = vmatpush1.msra.mxu0 0.0
    %1612 = vmatprep.subr.mxu0 0.0
    %1613 = vmatpush1.msra.mxu0 0.0
    %1614 = vmatprep.mubr.f32.mxu0 0.0
    %1615 = vmatmul.mubr.f32.gmra.mrb[0].mxu0 %v1545
    %v1616 = vpop.f32.mrb[0].mxu0
    %v1617 = vadd.f32 %v1543, %v1616
    %v1618 = vpop.f32.mrb[0].mxu0
    %1619 = vmatprep.mubr.f32.mxu0 0.0
    %1620 = vmatmul.mubr.f32.gmra.mrb[0].mxu0 %v1548
    %v1621 = vpop.f32.mrb[0].mxu0
    %v1622 = vadd.f32 %v1543, %v1621
    %v1623 = vpop.f32.mrb[0].mxu0
    %1624 = vdwg.mxu0
    %v1625 = vmax.f32 %v1617, 0.0
    %v1626 = vmax.f32 %v1622, 0.0
    %v1627 = vlaneseq
    %v1628 = vshrl.u32 %v1627, 7
    %v1629 = vsub.s32 5, %v1628
    %v1630 = vrot.slane %v42, %v1629
    %1631 = vmatprep.subr.mxu0 0.0
    %1632 = vmatpush1.msra.mxu0 %v1524
    %1633 = vmatprep.subr.mxu0 0.0
    %1634 = vmatpush1.msra.mxu0 %v1525
    %1635 = vmatprep.subr.mxu0 0.0
    %1636 = vmatpush1.msra.mxu0 %v1526
    %1637 = vmatprep.subr.mxu0 0.0
    %1638 = vmatpush1.msra.mxu0 %v1527
    %1639 = vmatprep.subr.mxu0 0.0
    %1640 = vmatpush1.msra.mxu0 %v1528
    %1641 = vmatprep.subr.mxu0 0.0
    %1642 = vmatpush1.msra.mxu0 %v1529
    %1643 = vmatprep.subr.mxu0 0.0
    %1644 = vmatpush1.msra.mxu0 %v1530
    %1645 = vmatprep.subr.mxu0 0.0
    %1646 = vmatpush1.msra.mxu0 %v1531
    %1647 = vmatprep.subr.mxu0 0.0
    %1648 = vmatpush1.msra.mxu0 %v1532
    %1649 = vmatprep.subr.mxu0 0.0
    %1650 = vmatpush1.msra.mxu0 %v1533
    %1651 = vmatprep.subr.mxu0 0.0
    %1652 = vmatpush1.msra.mxu0 %v1534
    %1653 = vmatprep.subr.mxu0 0.0
    %1654 = vmatpush1.msra.mxu0 %v1535
    %1655 = vmatprep.subr.mxu0 0.0
    %1656 = vmatpush1.msra.mxu0 %v1536
    %1657 = vmatprep.subr.mxu0 0.0
    %1658 = vmatpush1.msra.mxu0 %v1537
    %1659 = vmatprep.subr.mxu0 0.0
    %1660 = vmatpush1.msra.mxu0 %v1538
    %1661 = vmatprep.subr.mxu0 0.0
    %1662 = vmatpush1.msra.mxu0 %v1539
    %1663 = vmatprep.subr.mxu0 0.0
    %1664 = vmatpush1.msra.mxu0 0.0
    %1665 = vmatprep.subr.mxu0 0.0
    %1666 = vmatpush1.msra.mxu0 0.0
    %1667 = vmatprep.subr.mxu0 0.0
    %1668 = vmatpush1.msra.mxu0 0.0
    %1669 = vmatprep.subr.mxu0 0.0
    %1670 = vmatpush1.msra.mxu0 0.0
    %1671 = vmatprep.subr.mxu0 0.0
    %1672 = vmatpush1.msra.mxu0 0.0
    %1673 = vmatprep.subr.mxu0 0.0
    %1674 = vmatpush1.msra.mxu0 0.0
    %1675 = vmatprep.subr.mxu0 0.0
    %1676 = vmatpush1.msra.mxu0 0.0
    %1677 = vmatprep.subr.mxu0 0.0
    %1678 = vmatpush1.msra.mxu0 0.0
    %1679 = vmatprep.subr.mxu0 0.0
    %1680 = vmatpush1.msra.mxu0 0.0
    %1681 = vmatprep.subr.mxu0 0.0
    %1682 = vmatpush1.msra.mxu0 0.0
    %1683 = vmatprep.subr.mxu0 0.0
    %1684 = vmatpush1.msra.mxu0 0.0
    %1685 = vmatprep.subr.mxu0 0.0
    %1686 = vmatpush1.msra.mxu0 0.0
    %1687 = vmatprep.subr.mxu0 0.0
    %1688 = vmatpush1.msra.mxu0 0.0
    %1689 = vmatprep.subr.mxu0 0.0
    %1690 = vmatpush1.msra.mxu0 0.0
    %1691 = vmatprep.subr.mxu0 0.0
    %1692 = vmatpush1.msra.mxu0 0.0
    %1693 = vmatprep.subr.mxu0 0.0
    %1694 = vmatpush1.msra.mxu0 0.0
    %1695 = vmatprep.mubr.f32.mxu0 0.0
    %1696 = vmatmul.mubr.f32.gmra.mrb[0].mxu0 %v1625
    %v1697 = vpop.f32.mrb[0].mxu0
    %v1698 = vadd.f32 %v1630, %v1697
    %v1699 = vpop.f32.mrb[0].mxu0
    %1700 = vmatprep.mubr.f32.mxu0 0.0
    %1701 = vmatmul.mubr.f32.gmra.mrb[0].mxu0 %v1626
    %v1702 = vpop.f32.mrb[0].mxu0
    %v1703 = vadd.f32 %v1630, %v1702
    %v1704 = vpop.f32.mrb[0].mxu0
    %1705 = vdwg.mxu0
    %v1706 = vadd.f32 %v1480, %v1698
    %v1707 = vadd.f32 %v1481, %v1703
    %1708 = vst.msk [vmem:[#allocation7] sm:$0xff] %vm45, %v1706
    %1709 = vst.msk [vmem:[#allocation7 + $0x8] sm:$0xff] %vm45, %v1707
    // Predicated region
    $region18: #{block_forward.1} parent=1 // pred_check
      _
    $region19: #{block_forward.1} parent=1 // pred_check_branch
      %1711 = sbr.rel (0) target = $region21
    $region20: #{block_forward.1} parent=1 // pred_region
      %s1713 = ssub.s32 256, 256
      %1714 = vsyncadd [#allocation4], %s1713
      %s1715 = sshll.u32 [#allocation7], 4
      %s1716 = int_to_ptr.vmem [resolvable:$true] %s1715
      %1721 = dma.vmem_to_hbm [thread:$0]  %s1716, 256, %s2, [#allocation4], 128, 128, 8
    $region21: #{block_forward.1} parent=1 // pred_fallthru
      _
    // Predicated region
    $region22: #{block_forward.1} parent=1 // pred_check
      _
    $region23: #{block_forward.1} parent=1 // pred_check_branch
      %1723 = sbr.rel (0) target = $region25
    $region24: #{block_forward.1} parent=1 // pred_region
      %1724 = dma.done [#allocation4], 256
    $region25: #{block_forward.1} parent=1 // pred_fallthru
      _
    %1725 = vsyncpa [#allocation3], 1
    %1726 = vsyncpa [#allocation6], 1
    %1727 = vsyncpa [#allocation4], 1

</llo_original>
